<compile_context>
chip_gen: v7x
topology: tpu7x:2x2x1
jax: 0.10.0
libtpu: 0.0.40
codegen_flags: <defaults>
</compile_context>

<pallas_src>
import functools

import numpy as np
import jax
import jax.numpy as jnp
from jax import lax
from jax.experimental import pallas as pl
from jax.experimental.pallas import tpu as pltpu


# taps in PyTorch (kh, kw) row-major order; (dy, dx) = (kh-1, kw-1)
_TAPS = tuple((dy, dx) for dy in (-1, 0, 1) for dx in (-1, 0, 1))


def inverted_residual_kernel(x_ref, coef_ref, p_ref, o_ref, *,
                             W, Cin, Hid, Cout, use_res):
    x = x_ref[0]                                         # (Cin, L) f32
    L = x.shape[1]

    # Unpack the single packed parameter tile (Hid, Cin+Cout+3).
    pvals = p_ref[...]
    w1 = pvals[:, 0:Cin]                                 # (Hid, Cin)  expand conv (BN folded)
    b1 = pvals[:, Cin:Cin + 1]                           # (Hid, 1)
    b2 = pvals[:, Cin + 1:Cin + 2]                       # (Hid, 1)
    w3t = pvals[:, Cin + 2:Cin + 2 + Cout]               # (Hid, Cout) project conv, transposed
    b3 = pvals[:Cout, Cin + 2 + Cout:Cin + 3 + Cout]     # (Cout, 1)

    # 1x1 expand conv (FrozenBN folded) + ReLU6          -> (Hid, L)
    t1 = jnp.dot(w1, x, preferred_element_type=jnp.float32) + b1
    t1 = jnp.minimum(jnp.maximum(t1, 0.0), 6.0)

    # 3x3 depthwise (stride 1, pad 1): static lane rolls (XLU) + precombined
    # (mask * tap-weight) coefficient FMA on the VPU.
    #   out[:, p] += coef_k[:, p] * t1[:, p + dy*W + dx]
    acc = t1 * coef_ref[4]                               # center tap (0, 0)
    for k, (dy, dx) in enumerate(_TAPS):
        if dy == 0 and dx == 0:
            continue
        off = dy * W + dx
        rolled = pltpu.roll(t1, shift=(-off) % L, axis=1)  # rolled[:, p] = t1[:, p+off]
        acc = acc + rolled * coef_ref[k]
    t2 = jnp.minimum(jnp.maximum(acc + b2, 0.0), 6.0)    # (Hid, L)

    # 1x1 project conv (FrozenBN folded): out = w3 @ t2 = w3t^T @ t2 -> (Cout, L)
    out = lax.dot_general(w3t, t2, (((0,), (0,)), ((), ())),
                          preferred_element_type=jnp.float32) + b3
    if use_res:
        out = out + x
    o_ref[0] = out.astype(o_ref.dtype)


def make_coef(dw9, H, W, n_img):
    """coef[k, c, i*HW + q] = dw9[k, c] * (neighbor (dy,dx) of q is inside the image).

    Every lane whose (dy,dx)-neighbor falls outside its own image is zeroed, so
    lane rolls that wrap around the block (into a neighboring image or around
    the block edge) contribute nothing.
    """
    h = np.arange(H)[:, None]
    w = np.arange(W)[None, :]
    masks = []
    for dy, dx in _TAPS:
        valid = (h + dy >= 0) & (h + dy < H) & (w + dx >= 0) & (w + dx < W)
        masks.append(valid.reshape(-1).astype(np.float32))
    masks = jnp.asarray(np.stack(masks))                 # (9, HW)
    coef = dw9[:, :, None] * masks[:, None, :]           # (9, Hid, HW)
    return jnp.tile(coef, (1, 1, n_img))                 # (9, Hid, n_img*HW)


def pack_params(w1, b1, b2, w3, b3):
    """Pack all small parameters into one (Hid, Cin+Cout+3) tile (one DMA stream)."""
    Hid, Cin = w1.shape
    Cout = w3.shape[0]
    P = Cin + Cout + 3
    p = jnp.zeros((Hid, P), jnp.float32)
    p = p.at[:, 0:Cin].set(w1)
    p = p.at[:, Cin].set(b1)
    p = p.at[:, Cin + 1].set(b2)
    p = p.at[:, Cin + 2:Cin + 2 + Cout].set(w3.T)
    p = p.at[0:Cout, Cin + 2 + Cout].set(b3)
    return p


def _choose_blocks(N):
    """2 parallel blocks on dual-TensorCore chips (v7x) when the batch splits
    evenly; otherwise 1 fused block (amortizes per-step overhead on v5e/v6e)."""
    try:
        kind = jax.devices()[0].device_kind.lower()
    except Exception:
        kind = ""
    if "v7" in kind and N % 2 == 0:
        return 2
    return 1


def inverted_residual(x_nchw, folded_params, stride=1):
    assert stride == 1  # TODO(synk): stride=2 path not implemented
    N, Cin, H, W = x_nchw.shape
    w1, b1, dw9, b2, w3, b3 = folded_params
    Hid, Cout = w1.shape[0], w3.shape[0]
    HW = H * W
    use_res = (stride == 1 and Cin == Cout)

    n_blocks = _choose_blocks(N)
    n_img = N // n_blocks
    L = n_img * HW

    # channels-first; images of a block concatenated along the lane (spatial) axis
    x_blk = jnp.reshape(
        jnp.transpose(x_nchw.reshape(n_blocks, n_img, Cin, HW), (0, 2, 1, 3)),
        (n_blocks, Cin, L))

    coef = make_coef(dw9, H, W, n_img)      # (9, Hid, L)  mask * tap-weight, BN folded
    pparams = pack_params(w1, b1, b2, w3, b3)  # (Hid, P)
    P = pparams.shape[1]

    flops = 2 * N * HW * Hid * (Cin + Cout) + 2 * 9 * N * HW * Hid
    bytes_accessed = 4 * (N * HW * (Cin + Cout) + 9 * Hid * L + Hid * P)
    cost = pl.CostEstimate(flops=flops, transcendentals=0,
                           bytes_accessed=bytes_accessed)

    kernel = functools.partial(inverted_residual_kernel, W=W, Cin=Cin, Hid=Hid,
                               Cout=Cout, use_res=use_res)
    out_blk = pl.pallas_call(
        kernel,
        out_shape=jax.ShapeDtypeStruct((n_blocks, Cout, L), jnp.float32),
        grid_spec=pltpu.PrefetchScalarGridSpec(
            num_scalar_prefetch=0,
            grid=(n_blocks,),
            in_specs=[
                pl.BlockSpec((1, Cin, L), lambda n: (n, 0, 0)),    # x block
                pl.BlockSpec((9, Hid, L), lambda n: (0, 0, 0)),    # depthwise coef (resident)
                pl.BlockSpec((Hid, P), lambda n: (0, 0)),          # packed w1|b1|b2|w3^T|b3
            ],
            out_specs=pl.BlockSpec((1, Cout, L), lambda n: (n, 0, 0)),
        ),
        compiler_params=pltpu.CompilerParams(
            dimension_semantics=("parallel",)),
        cost_estimate=cost,
    )(x_blk, coef, pparams)

    out = jnp.reshape(
        jnp.transpose(out_blk.reshape(n_blocks, Cout, n_img, HW), (0, 2, 1, 3)),
        (N, Cout, H, W))
    return out


def make_params(key, inp, oup, expand_ratio, eps=1e-5):
    hidden = int(round(inp * expand_ratio))
    ks = jax.random.split(key, 15)

    # conv weights in PyTorch layout
    w1_t = 0.2 * jax.random.normal(ks[0], (hidden, inp, 1, 1), jnp.float32)
    dw_t = 0.2 * jax.random.normal(ks[1], (hidden, 1, 3, 3), jnp.float32)
    w3_t = 0.2 * jax.random.normal(ks[2], (oup, hidden, 1, 1), jnp.float32)

    def frozen_bn(k0, k1, k2, k3, c):
        weight = 1.0 + 0.1 * jax.random.normal(k0, (c,), jnp.float32)
        bias = 0.1 * jax.random.normal(k1, (c,), jnp.float32)
        mean = 0.1 * jax.random.normal(k2, (c,), jnp.float32)
        var = 0.5 + jnp.abs(jax.random.normal(k3, (c,), jnp.float32))
        scale = weight / jnp.sqrt(var + eps)
        shift = bias - mean * scale
        return scale, shift

    s1, sh1 = frozen_bn(ks[3], ks[4], ks[5], ks[6], hidden)
    s2, sh2 = frozen_bn(ks[7], ks[8], ks[9], ks[10], hidden)
    s3, sh3 = frozen_bn(ks[11], ks[12], ks[13], ks[14], oup)

    # fold BN into conv weights; channels-first matmul layouts for the kernel
    w1 = w1_t[:, :, 0, 0] * s1[:, None]                              # (hidden, inp)
    b1 = sh1                                                         # (hidden,)
    dw9 = jnp.transpose(dw_t[:, 0, :, :].reshape(hidden, 9) * s2[:, None])  # (9, hidden)
    b2 = sh2                                                         # (hidden,)
    w3 = w3_t[:, :, 0, 0] * s3[:, None]                              # (oup, hidden)
    b3 = sh3                                                         # (oup,)

    torch_params = (w1_t, dw_t, w3_t, (s1, sh1), (s2, sh2), (s3, sh3))
    folded = (w1, b1, dw9, b2, w3, b3)
    return torch_params, folded


def reference(x, torch_params, stride, use_res):
    """Pure-JAX reference mirroring the PyTorch forward (NCHW)."""
    w1_t, dw_t, w3_t, (s1, sh1), (s2, sh2), (s3, sh3) = torch_params
    dn = ("NCHW", "OIHW", "NCHW")

    def bn(y, s, sh):
        return y * s[None, :, None, None] + sh[None, :, None, None]

    hidden = dw_t.shape[0]
    y = lax.conv_general_dilated(x, w1_t, (1, 1), "VALID", dimension_numbers=dn)
    y = jnp.clip(bn(y, s1, sh1), 0.0, 6.0)
    y = lax.conv_general_dilated(y, dw_t, (stride, stride), ((1, 1), (1, 1)),
                                 dimension_numbers=dn, feature_group_count=hidden)
    y = jnp.clip(bn(y, s2, sh2), 0.0, 6.0)
    y = lax.conv_general_dilated(y, w3_t, (1, 1), "VALID", dimension_numbers=dn)
    y = bn(y, s3, sh3)
    return x + y if use_res else y


if __name__ == "__main__":
    key = jax.random.PRNGKey(0)
    kx, kp = jax.random.split(key)

    N, Cin, H, W = 2, 8, 16, 16
    oup, expand_ratio, stride = 8, 4, 1   # use_res_connect == True branch

    x = jax.random.normal(kx, (N, Cin, H, W), jnp.float32)
    torch_params, folded = make_params(kp, Cin, oup, expand_ratio)

    y = inverted_residual(x, folded, stride=stride)
    y = jax.block_until_ready(y)

    y_ref = reference(x, torch_params, stride, use_res=True)
    err = float(jnp.max(jnp.abs(y - y_ref)))
    assert err < 1e-3, f"max abs err {err}"
    print("KERNEL_OK")
</pallas_src>

<mosaic_0001>
module attributes {stable_mosaic.version = 11 : i64} {
  func.func @inverted_residual_kernel(%arg0: i32, %arg1: memref<1x8x512xf32, #tpu.memory_space<vmem>>, %arg2: memref<9x32x512xf32, #tpu.memory_space<vmem>>, %arg3: memref<32x19xf32, #tpu.memory_space<vmem>>, %arg4: memref<1x8x512xf32, #tpu.memory_space<vmem>>) attributes {dimension_semantics = [#tpu.dimension_semantics<parallel>], iteration_bounds = array<i64: 1>, scalar_prefetch = 0 : i64, scratch_operands = 0 : i64, tpu.core_type = #tpu.core_type<tc>, window_params = [{transform_indices = @transform_0, window_bounds = array<i64: 1, 8, 512>}, {pipeline_mode = #tpu.pipeline_mode<synchronous>, transform_indices = @transform_1, window_bounds = array<i64: 9, 32, 512>}, {pipeline_mode = #tpu.pipeline_mode<synchronous>, transform_indices = @transform_2, window_bounds = array<i64: 32, 19>}, {transform_indices = @transform_3, window_bounds = array<i64: 1, 8, 512>}]} {
    %c0 = arith.constant 0 : index
    %c0_0 = arith.constant 0 : index
    %c0_1 = arith.constant 0 : index
    %0 = vector.load %arg1[%c0, %c0_0, %c0_1] : memref<1x8x512xf32, #tpu.memory_space<vmem>>, vector<1x8x512xf32>
    %1 = vector.shape_cast %0 : vector<1x8x512xf32> to vector<8x512xf32>
    %c0_2 = arith.constant 0 : index
    %c0_3 = arith.constant 0 : index
    %2 = vector.load %arg3[%c0_2, %c0_3] : memref<32x19xf32, #tpu.memory_space<vmem>>, vector<32x19xf32>
    %3 = vector.extract_strided_slice %2 {offsets = [0, 0], sizes = [32, 8], strides = [1, 1]} : vector<32x19xf32> to vector<32x8xf32>
    %4 = vector.extract_strided_slice %2 {offsets = [0, 8], sizes = [32, 1], strides = [1, 1]} : vector<32x19xf32> to vector<32x1xf32>
    %5 = vector.extract_strided_slice %2 {offsets = [0, 9], sizes = [32, 1], strides = [1, 1]} : vector<32x19xf32> to vector<32x1xf32>
    %6 = vector.extract_strided_slice %2 {offsets = [0, 10], sizes = [32, 8], strides = [1, 1]} : vector<32x19xf32> to vector<32x8xf32>
    %7 = vector.extract_strided_slice %2 {offsets = [0, 18], sizes = [8, 1], strides = [1, 1]} : vector<32x19xf32> to vector<8x1xf32>
    %cst = arith.constant dense<0.000000e+00> : vector<32x512xf32>
    %8 = tpu.matmul %3, %1, %cst {dimension_numbers = #tpu.dot_dimension_numbers<[1], [0], [0], [1], [0, 0, 1, 1], [], []>} : vector<32x8xf32>, vector<8x512xf32>, vector<32x512xf32> -> vector<32x512xf32>
    %9 = vector.broadcast %4 : vector<32x1xf32> to vector<32x512xf32>
    %10 = arith.addf %8, %9 : vector<32x512xf32>
    %cst_4 = arith.constant 0.000000e+00 : f32
    %11 = vector.broadcast %cst_4 : f32 to vector<32x512xf32>
    %12 = arith.maximumf %10, %11 : vector<32x512xf32>
    %cst_5 = arith.constant 6.000000e+00 : f32
    %13 = vector.broadcast %cst_5 : f32 to vector<32x512xf32>
    %14 = arith.minimumf %12, %13 : vector<32x512xf32>
    %c4 = arith.constant 4 : index
    %c0_6 = arith.constant 0 : index
    %c0_7 = arith.constant 0 : index
    %15 = vector.load %arg2[%c4, %c0_6, %c0_7] : memref<9x32x512xf32, #tpu.memory_space<vmem>>, vector<1x32x512xf32>
    %16 = vector.shape_cast %15 : vector<1x32x512xf32> to vector<32x512xf32>
    %17 = arith.mulf %14, %16 : vector<32x512xf32>
    %c17_i32 = arith.constant 17 : i32
    %18 = tpu.dynamic_rotate %14 by %c17_i32 dim 1 : vector<32x512xf32>, i32 -> vector<32x512xf32>
    %c0_8 = arith.constant 0 : index
    %c0_9 = arith.constant 0 : index
    %c0_10 = arith.constant 0 : index
    %19 = vector.load %arg2[%c0_8, %c0_9, %c0_10] : memref<9x32x512xf32, #tpu.memory_space<vmem>>, vector<1x32x512xf32>
    %20 = vector.shape_cast %19 : vector<1x32x512xf32> to vector<32x512xf32>
    %21 = arith.mulf %18, %20 : vector<32x512xf32>
    %22 = arith.addf %17, %21 : vector<32x512xf32>
    %c16_i32 = arith.constant 16 : i32
    %23 = tpu.dynamic_rotate %14 by %c16_i32 dim 1 : vector<32x512xf32>, i32 -> vector<32x512xf32>
    %c1 = arith.constant 1 : index
    %c0_11 = arith.constant 0 : index
    %c0_12 = arith.constant 0 : index
    %24 = vector.load %arg2[%c1, %c0_11, %c0_12] : memref<9x32x512xf32, #tpu.memory_space<vmem>>, vector<1x32x512xf32>
    %25 = vector.shape_cast %24 : vector<1x32x512xf32> to vector<32x512xf32>
    %26 = arith.mulf %23, %25 : vector<32x512xf32>
    %27 = arith.addf %22, %26 : vector<32x512xf32>
    %c15_i32 = arith.constant 15 : i32
    %28 = tpu.dynamic_rotate %14 by %c15_i32 dim 1 : vector<32x512xf32>, i32 -> vector<32x512xf32>
    %c2 = arith.constant 2 : index
    %c0_13 = arith.constant 0 : index
    %c0_14 = arith.constant 0 : index
    %29 = vector.load %arg2[%c2, %c0_13, %c0_14] : memref<9x32x512xf32, #tpu.memory_space<vmem>>, vector<1x32x512xf32>
    %30 = vector.shape_cast %29 : vector<1x32x512xf32> to vector<32x512xf32>
    %31 = arith.mulf %28, %30 : vector<32x512xf32>
    %32 = arith.addf %27, %31 : vector<32x512xf32>
    %c1_i32 = arith.constant 1 : i32
    %33 = tpu.dynamic_rotate %14 by %c1_i32 dim 1 : vector<32x512xf32>, i32 -> vector<32x512xf32>
    %c3 = arith.constant 3 : index
    %c0_15 = arith.constant 0 : index
    %c0_16 = arith.constant 0 : index
    %34 = vector.load %arg2[%c3, %c0_15, %c0_16] : memref<9x32x512xf32, #tpu.memory_space<vmem>>, vector<1x32x512xf32>
    %35 = vector.shape_cast %34 : vector<1x32x512xf32> to vector<32x512xf32>
    %36 = arith.mulf %33, %35 : vector<32x512xf32>
    %37 = arith.addf %32, %36 : vector<32x512xf32>
    %c511_i32 = arith.constant 511 : i32
    %38 = tpu.dynamic_rotate %14 by %c511_i32 dim 1 : vector<32x512xf32>, i32 -> vector<32x512xf32>
    %c5 = arith.constant 5 : index
    %c0_17 = arith.constant 0 : index
    %c0_18 = arith.constant 0 : index
    %39 = vector.load %arg2[%c5, %c0_17, %c0_18] : memref<9x32x512xf32, #tpu.memory_space<vmem>>, vector<1x32x512xf32>
    %40 = vector.shape_cast %39 : vector<1x32x512xf32> to vector<32x512xf32>
    %41 = arith.mulf %38, %40 : vector<32x512xf32>
    %42 = arith.addf %37, %41 : vector<32x512xf32>
    %c497_i32 = arith.constant 497 : i32
    %43 = tpu.dynamic_rotate %14 by %c497_i32 dim 1 : vector<32x512xf32>, i32 -> vector<32x512xf32>
    %c6 = arith.constant 6 : index
    %c0_19 = arith.constant 0 : index
    %c0_20 = arith.constant 0 : index
    %44 = vector.load %arg2[%c6, %c0_19, %c0_20] : memref<9x32x512xf32, #tpu.memory_space<vmem>>, vector<1x32x512xf32>
    %45 = vector.shape_cast %44 : vector<1x32x512xf32> to vector<32x512xf32>
    %46 = arith.mulf %43, %45 : vector<32x512xf32>
    %47 = arith.addf %42, %46 : vector<32x512xf32>
    %c496_i32 = arith.constant 496 : i32
    %48 = tpu.dynamic_rotate %14 by %c496_i32 dim 1 : vector<32x512xf32>, i32 -> vector<32x512xf32>
    %c7 = arith.constant 7 : index
    %c0_21 = arith.constant 0 : index
    %c0_22 = arith.constant 0 : index
    %49 = vector.load %arg2[%c7, %c0_21, %c0_22] : memref<9x32x512xf32, #tpu.memory_space<vmem>>, vector<1x32x512xf32>
    %50 = vector.shape_cast %49 : vector<1x32x512xf32> to vector<32x512xf32>
    %51 = arith.mulf %48, %50 : vector<32x512xf32>
    %52 = arith.addf %47, %51 : vector<32x512xf32>
    %c495_i32 = arith.constant 495 : i32
    %53 = tpu.dynamic_rotate %14 by %c495_i32 dim 1 : vector<32x512xf32>, i32 -> vector<32x512xf32>
    %c8 = arith.constant 8 : index
    %c0_23 = arith.constant 0 : index
    %c0_24 = arith.constant 0 : index
    %54 = vector.load %arg2[%c8, %c0_23, %c0_24] : memref<9x32x512xf32, #tpu.memory_space<vmem>>, vector<1x32x512xf32>
    %55 = vector.shape_cast %54 : vector<1x32x512xf32> to vector<32x512xf32>
    %56 = arith.mulf %53, %55 : vector<32x512xf32>
    %57 = arith.addf %52, %56 : vector<32x512xf32>
    %58 = vector.broadcast %5 : vector<32x1xf32> to vector<32x512xf32>
    %59 = arith.addf %57, %58 : vector<32x512xf32>
    %cst_25 = arith.constant 0.000000e+00 : f32
    %60 = vector.broadcast %cst_25 : f32 to vector<32x512xf32>
    %61 = arith.maximumf %59, %60 : vector<32x512xf32>
    %cst_26 = arith.constant 6.000000e+00 : f32
    %62 = vector.broadcast %cst_26 : f32 to vector<32x512xf32>
    %63 = arith.minimumf %61, %62 : vector<32x512xf32>
    %cst_27 = arith.constant dense<0.000000e+00> : vector<8x512xf32>
    %64 = tpu.matmul %6, %63, %cst_27 {dimension_numbers = #tpu.dot_dimension_numbers<[0], [0], [1], [1], [0, 1, 1, 1], [], []>} : vector<32x8xf32>, vector<32x512xf32>, vector<8x512xf32> -> vector<8x512xf32>
    %65 = vector.broadcast %7 : vector<8x1xf32> to vector<8x512xf32>
    %66 = arith.addf %64, %65 : vector<8x512xf32>
    %67 = arith.addf %66, %1 : vector<8x512xf32>
    %c0_28 = arith.constant 0 : index
    %c0_29 = arith.constant 0 : index
    %c0_30 = arith.constant 0 : index
    %68 = vector.load %arg4[%c0_28, %c0_29, %c0_30] : memref<1x8x512xf32, #tpu.memory_space<vmem>>, vector<1x8x512xf32>
    %69 = vector.shape_cast %68 : vector<1x8x512xf32> to vector<8x512xf32>
    %70 = vector.shape_cast %67 : vector<8x512xf32> to vector<1x8x512xf32>
    tpu.vector_store %arg4[%c0_28, %c0_29, %c0_30], %70 {strides = array<i32>} : memref<1x8x512xf32, #tpu.memory_space<vmem>>, vector<1x8x512xf32>,
    return
  }
  func.func @transform_0(%arg0: i32) -> (i32, i32, i32) {
    %c0_i32 = arith.constant 0 : i32
    %c0_i32_0 = arith.constant 0 : i32
    %c0_i32_1 = arith.constant 0 : i32
    return %arg0, %c0_i32, %c0_i32_0 : i32, i32, i32
  }
  func.func @transform_1(%arg0: i32) -> (i32, i32, i32) {
    %c0_i32 = arith.constant 0 : i32
    %c0_i32_0 = arith.constant 0 : i32
    %c0_i32_1 = arith.constant 0 : i32
    %c0_i32_2 = arith.constant 0 : i32
    return %c0_i32, %c0_i32_0, %c0_i32_1 : i32, i32, i32
  }
  func.func @transform_2(%arg0: i32) -> (i32, i32) {
    %c0_i32 = arith.constant 0 : i32
    %c0_i32_0 = arith.constant 0 : i32
    %c0_i32_1 = arith.constant 0 : i32
    return %c0_i32, %c0_i32_0 : i32, i32
  }
  func.func @transform_3(%arg0: i32) -> (i32, i32, i32) {
    %c0_i32 = arith.constant 0 : i32
    %c0_i32_0 = arith.constant 0 : i32
    %c0_i32_1 = arith.constant 0 : i32
    return %arg0, %c0_i32, %c0_i32_0 : i32, i32, i32
  }
}

</mosaic_0001>

<llo_original>
// kernel: tpu_custom_call.1
$region0: #{tpu_custom_call.1}
  #allocation0 [shape = 'u32[]', space=smem, size = 0x4, offset = 0x4, fixed_abs, tag = 'smem constant byte address 0x4 - core index']
  #allocation1 [shape = 'u32[144,128]{1,0:T(1,128)}', space=vmem, size = 0x12000, scoped, tag = 'internal scratch']
  %s0 = inlined_call_operand.vmem [shape: f32[1,8,512], index: 0, kind: input, shape index: {}]
  %s1 = inlined_call_operand.hbm [shape: f32[9,32,512], index: 1, kind: input, shape index: {}]
  %s2 = inlined_call_operand.vmem [shape: f32[32,19], index: 2, kind: input, shape index: {}]
  %s3 = inlined_call_operand.hbm [shape: f32[1,8,512], index: 3, kind: output, shape index: {}]
  %s4 = sld [smem:[#allocation0]]
  $region26: #{tpu_custom_call.1} parent=0
    _
  %s6 = ssub.s32 1, %s4
  %s7 = scalar_select 0, %s6, %s4
  $region1: #{tpu_custom_call.1} parent=0
    #allocation2 [shape = 'u8[589824]{0}', space=vmem, size = 0x90000, scoped, tag = 'input window, operand 1, single buffered']
    #allocation3 [shape = 's32[1]{0}', space=sflag, size = 0x4, scoped, tag = 'scoped memory for tpu_custom_call.1']
    #allocation4 [shape = 's32[1]{0}', space=sflag, size = 0x4, scoped, tag = 'scoped memory for tpu_custom_call.1']
    #allocation5 [shape = 'u8[16384]{0}', space=vmem, size = 0x4000, scoped, tag = 'output window, operand 0, single buffered']
    %8 = vsyncpa [#allocation3], 0
    %9 = vsyncpa [#allocation4], 0
    // Predicated region
    $region2: #{tpu_custom_call.1} parent=1 // pred_check
      _
    $region3: #{tpu_custom_call.1} parent=1 // pred_check_branch
      %11 = sbr.rel (0) target = $region5
    $region4: #{tpu_custom_call.1} parent=1 // pred_region
      _
    $region5: #{tpu_custom_call.1} parent=1 // pred_fallthru
      _
    // Predicated region
    $region6: #{tpu_custom_call.1} parent=1 // pred_check
      _
    $region7: #{tpu_custom_call.1} parent=1 // pred_check_branch
      %13 = sbr.rel (0) target = $region9
    $region8: #{tpu_custom_call.1} parent=1 // pred_region
      %s15 = ssub.s32 18432, 18432
      %16 = vsyncadd [#allocation3], %s15
      %s17 = sshll.u32 [#allocation2], 4
      %s18 = int_to_ptr.vmem [resolvable:$true] %s17
      %23 = dma.hbm_to_vmem [thread:$0]  %s1, 18432, %s18, [#allocation3], 512, 512, 32
    $region9: #{tpu_custom_call.1} parent=1 // pred_fallthru
      _
    // Predicated region
    $region10: #{tpu_custom_call.1} parent=1 // pred_check
      _
    $region11: #{tpu_custom_call.1} parent=1 // pred_check_branch
      %25 = sbr.rel (0) target = $region13
    $region12: #{tpu_custom_call.1} parent=1 // pred_region
      _
    $region13: #{tpu_custom_call.1} parent=1 // pred_fallthru
      _
    // Predicated region
    $region14: #{tpu_custom_call.1} parent=1 // pred_check
      _
    $region15: #{tpu_custom_call.1} parent=1 // pred_check_branch
      %27 = sbr.rel (0) target = $region17
    $region16: #{tpu_custom_call.1} parent=1 // pred_region
      %28 = dma.done [#allocation3], 18432
    $region17: #{tpu_custom_call.1} parent=1 // pred_fallthru
      _
    %v29 = vld [vmem:[%s0] sm:$0xff]
    %v30 = vld [vmem:[%s0 + $0x8] sm:$0xff]
    %v31 = vld [vmem:[%s0 + $0x10] sm:$0xff]
    %v32 = vld [vmem:[%s0 + $0x18] sm:$0xff]
    %v33 = vld [vmem:[%s2] sm:$0xff]
    %v34 = vld [vmem:[%s2 + $0x8] sm:$0xff]
    %v35 = vld [vmem:[%s2 + $0x10] sm:$0xff]
    %v36 = vld [vmem:[%s2 + $0x18] sm:$0xff]
    %38 = vset.pattern.permute.xlu0 8
    %39 = vperm.xlu0 %38, %v33
    %v40 = vpop.permute.xlu0 %39
    %43 = vset.pattern.permute.xlu0 8
    %44 = vperm.xlu0 %43, %v34
    %v45 = vpop.permute.xlu0 %44
    %48 = vset.pattern.permute.xlu0 8
    %49 = vperm.xlu0 %48, %v35
    %v50 = vpop.permute.xlu0 %49
    %53 = vset.pattern.permute.xlu0 8
    %54 = vperm.xlu0 %53, %v36
    %v55 = vpop.permute.xlu0 %54
    %vm57 = vcmask 64512
    %v58 = vsel %vm57, %v33, 0
    %v60 = vsel %vm57, %v34, 0
    %v62 = vsel %vm57, %v35, 0
    %v64 = vsel %vm57, %v36, 0
    %66 = vmatprep.subr.mxu0 %v30
    %67 = vmatpush1.msra.mxu0 %v29
    %68 = vmatprep.subr.mxu0 0.0
    %69 = vmatpush1.msra.mxu0 0.0
    %70 = vmatprep.subr.mxu0 0.0
    %71 = vmatpush1.msra.mxu0 0.0
    %72 = vmatprep.subr.mxu0 0.0
    %73 = vmatpush1.msra.mxu0 0.0
    %74 = vmatprep.subr.mxu0 0.0
    %75 = vmatpush1.msra.mxu0 0.0
    %76 = vmatprep.subr.mxu0 0.0
    %77 = vmatpush1.msra.mxu0 0.0
    %78 = vmatprep.subr.mxu0 0.0
    %79 = vmatpush1.msra.mxu0 0.0
    %80 = vmatprep.subr.mxu0 0.0
    %81 = vmatpush1.msra.mxu0 0.0
    %82 = vmatprep.subr.mxu0 0.0
    %83 = vmatpush1.msra.mxu0 0.0
    %84 = vmatprep.subr.mxu0 0.0
    %85 = vmatpush1.msra.mxu0 0.0
    %86 = vmatprep.subr.mxu0 0.0
    %87 = vmatpush1.msra.mxu0 0.0
    %88 = vmatprep.subr.mxu0 0.0
    %89 = vmatpush1.msra.mxu0 0.0
    %90 = vmatprep.subr.mxu0 0.0
    %91 = vmatpush1.msra.mxu0 0.0
    %92 = vmatprep.subr.mxu0 0.0
    %93 = vmatpush1.msra.mxu0 0.0
    %94 = vmatprep.subr.mxu0 0.0
    %95 = vmatpush1.msra.mxu0 0.0
    %96 = vmatprep.subr.mxu0 0.0
    %97 = vmatpush1.msra.mxu0 0.0
    %98 = vmatprep.subr.mxu0 0.0
    %99 = vmatpush1.msra.mxu0 0.0
    %100 = vmatprep.subr.mxu0 0.0
    %101 = vmatpush1.msra.mxu0 0.0
    %102 = vmatprep.subr.mxu0 0.0
    %103 = vmatpush1.msra.mxu0 0.0
    %104 = vmatprep.subr.mxu0 0.0
    %105 = vmatpush1.msra.mxu0 0.0
    %106 = vmatprep.subr.mxu0 0.0
    %107 = vmatpush1.msra.mxu0 0.0
    %108 = vmatprep.subr.mxu0 0.0
    %109 = vmatpush1.msra.mxu0 0.0
    %110 = vmatprep.subr.mxu0 0.0
    %111 = vmatpush1.msra.mxu0 0.0
    %112 = vmatprep.subr.mxu0 0.0
    %113 = vmatpush1.msra.mxu0 0.0
    %114 = vmatprep.subr.mxu0 0.0
    %115 = vmatpush1.msra.mxu0 0.0
    %116 = vmatprep.subr.mxu0 0.0
    %117 = vmatpush1.msra.mxu0 0.0
    %118 = vmatprep.subr.mxu0 0.0
    %119 = vmatpush1.msra.mxu0 0.0
    %120 = vmatprep.subr.mxu0 0.0
    %121 = vmatpush1.msra.mxu0 0.0
    %122 = vmatprep.subr.mxu0 0.0
    %123 = vmatpush1.msra.mxu0 0.0
    %124 = vmatprep.subr.mxu0 0.0
    %125 = vmatpush1.msra.mxu0 0.0
    %126 = vmatprep.subr.mxu0 0.0
    %127 = vmatpush1.msra.mxu0 0.0
    %128 = vmatprep.subr.mxu0 0.0
    %129 = vmatpush1.msra.mxu0 0.0
    %130 = vmatprep.mubr.f32.mxu0 0.0
    %131 = vmatmul.mubr.f32.gmra.mrb[0].mxu0 %v58
    %v132 = vpop.f32.mrb[0].mxu0
    %v133 = vadd.f32 %v40, %v132
    %v134 = vpop.f32.mrb[0].mxu0
    %v135 = vadd.f32 %v40, %v134
    %136 = vmatprep.mubr.f32.mxu0 0.0
    %137 = vmatmul.mubr.f32.gmra.mrb[0].mxu0 %v60
    %v138 = vpop.f32.mrb[0].mxu0
    %v139 = vadd.f32 %v45, %v138
    %v140 = vpop.f32.mrb[0].mxu0
    %v141 = vadd.f32 %v45, %v140
    %142 = vmatprep.mubr.f32.mxu0 0.0
    %143 = vmatmul.mubr.f32.gmra.mrb[0].mxu0 %v62
    %v144 = vpop.f32.mrb[0].mxu0
    %v145 = vadd.f32 %v50, %v144
    %v146 = vpop.f32.mrb[0].mxu0
    %v147 = vadd.f32 %v50, %v146
    %148 = vmatprep.mubr.f32.mxu0 0.0
    %149 = vmatmul.mubr.f32.gmra.mrb[0].mxu0 %v64
    %v150 = vpop.f32.mrb[0].mxu0
    %v151 = vadd.f32 %v55, %v150
    %v152 = vpop.f32.mrb[0].mxu0
    %v153 = vadd.f32 %v55, %v152
    %154 = vdwg.mxu0
    %155 = vmatprep.subr.mxu0 %v32
    %156 = vmatpush1.msra.mxu0 %v31
    %157 = vmatprep.subr.mxu0 0.0
    %158 = vmatpush1.msra.mxu0 0.0
    %159 = vmatprep.subr.mxu0 0.0
    %160 = vmatpush1.msra.mxu0 0.0
    %161 = vmatprep.subr.mxu0 0.0
    %162 = vmatpush1.msra.mxu0 0.0
    %163 = vmatprep.subr.mxu0 0.0
    %164 = vmatpush1.msra.mxu0 0.0
    %165 = vmatprep.subr.mxu0 0.0
    %166 = vmatpush1.msra.mxu0 0.0
    %167 = vmatprep.subr.mxu0 0.0
    %168 = vmatpush1.msra.mxu0 0.0
    %169 = vmatprep.subr.mxu0 0.0
    %170 = vmatpush1.msra.mxu0 0.0
    %171 = vmatprep.subr.mxu0 0.0
    %172 = vmatpush1.msra.mxu0 0.0
    %173 = vmatprep.subr.mxu0 0.0
    %174 = vmatpush1.msra.mxu0 0.0
    %175 = vmatprep.subr.mxu0 0.0
    %176 = vmatpush1.msra.mxu0 0.0
    %177 = vmatprep.subr.mxu0 0.0
    %178 = vmatpush1.msra.mxu0 0.0
    %179 = vmatprep.subr.mxu0 0.0
    %180 = vmatpush1.msra.mxu0 0.0
    %181 = vmatprep.subr.mxu0 0.0
    %182 = vmatpush1.msra.mxu0 0.0
    %183 = vmatprep.subr.mxu0 0.0
    %184 = vmatpush1.msra.mxu0 0.0
    %185 = vmatprep.subr.mxu0 0.0
    %186 = vmatpush1.msra.mxu0 0.0
    %187 = vmatprep.subr.mxu0 0.0
    %188 = vmatpush1.msra.mxu0 0.0
    %189 = vmatprep.subr.mxu0 0.0
    %190 = vmatpush1.msra.mxu0 0.0
    %191 = vmatprep.subr.mxu0 0.0
    %192 = vmatpush1.msra.mxu0 0.0
    %193 = vmatprep.subr.mxu0 0.0
    %194 = vmatpush1.msra.mxu0 0.0
    %195 = vmatprep.subr.mxu0 0.0
    %196 = vmatpush1.msra.mxu0 0.0
    %197 = vmatprep.subr.mxu0 0.0
    %198 = vmatpush1.msra.mxu0 0.0
    %199 = vmatprep.subr.mxu0 0.0
    %200 = vmatpush1.msra.mxu0 0.0
    %201 = vmatprep.subr.mxu0 0.0
    %202 = vmatpush1.msra.mxu0 0.0
    %203 = vmatprep.subr.mxu0 0.0
    %204 = vmatpush1.msra.mxu0 0.0
    %205 = vmatprep.subr.mxu0 0.0
    %206 = vmatpush1.msra.mxu0 0.0
    %207 = vmatprep.subr.mxu0 0.0
    %208 = vmatpush1.msra.mxu0 0.0
    %209 = vmatprep.subr.mxu0 0.0
    %210 = vmatpush1.msra.mxu0 0.0
    %211 = vmatprep.subr.mxu0 0.0
    %212 = vmatpush1.msra.mxu0 0.0
    %213 = vmatprep.subr.mxu0 0.0
    %214 = vmatpush1.msra.mxu0 0.0
    %215 = vmatprep.subr.mxu0 0.0
    %216 = vmatpush1.msra.mxu0 0.0
    %217 = vmatprep.subr.mxu0 0.0
    %218 = vmatpush1.msra.mxu0 0.0
    %219 = vmatprep.mubr.f32.mxu0 0.0
    %220 = vmatmul.mubr.f32.gmra.mrb[0].mxu0 %v58
    %v221 = vpop.f32.mrb[0].mxu0
    %v222 = vadd.f32 %v40, %v221
    %v223 = vpop.f32.mrb[0].mxu0
    %v224 = vadd.f32 %v40, %v223
    %225 = vmatprep.mubr.f32.mxu0 0.0
    %226 = vmatmul.mubr.f32.gmra.mrb[0].mxu0 %v60
    %v227 = vpop.f32.mrb[0].mxu0
    %v228 = vadd.f32 %v45, %v227
    %v229 = vpop.f32.mrb[0].mxu0
    %v230 = vadd.f32 %v45, %v229
    %231 = vmatprep.mubr.f32.mxu0 0.0
    %232 = vmatmul.mubr.f32.gmra.mrb[0].mxu0 %v62
    %v233 = vpop.f32.mrb[0].mxu0
    %v234 = vadd.f32 %v50, %v233
    %v235 = vpop.f32.mrb[0].mxu0
    %v236 = vadd.f32 %v50, %v235
    %237 = vmatprep.mubr.f32.mxu0 0.0
    %238 = vmatmul.mubr.f32.gmra.mrb[0].mxu0 %v64
    %v239 = vpop.f32.mrb[0].mxu0
    %v240 = vadd.f32 %v55, %v239
    %v241 = vpop.f32.mrb[0].mxu0
    %v242 = vadd.f32 %v55, %v241
    %243 = vdwg.mxu0
    %v244 = vmax.f32 %v133, 0.0
    %v245 = vmax.f32 %v135, 0.0
    %v246 = vmax.f32 %v222, 0.0
    %v247 = vmax.f32 %v224, 0.0
    %v248 = vmax.f32 %v139, 0.0
    %v249 = vmax.f32 %v141, 0.0
    %v250 = vmax.f32 %v228, 0.0
    %v251 = vmax.f32 %v230, 0.0
    %v252 = vmax.f32 %v145, 0.0
    %v253 = vmax.f32 %v147, 0.0
    %v254 = vmax.f32 %v234, 0.0
    %v255 = vmax.f32 %v236, 0.0
    %v256 = vmax.f32 %v151, 0.0
    %v257 = vmax.f32 %v153, 0.0
    %v258 = vmax.f32 %v240, 0.0
    %v259 = vmax.f32 %v242, 0.0
    %v260 = vmin.f32 %v244, 6.0
    %v261 = vmin.f32 %v245, 6.0
    %v262 = vmin.f32 %v246, 6.0
    %v263 = vmin.f32 %v247, 6.0
    %v264 = vmin.f32 %v248, 6.0
    %v265 = vmin.f32 %v249, 6.0
    %v266 = vmin.f32 %v250, 6.0
    %v267 = vmin.f32 %v251, 6.0
    %v268 = vmin.f32 %v252, 6.0
    %v269 = vmin.f32 %v253, 6.0
    %v270 = vmin.f32 %v254, 6.0
    %v271 = vmin.f32 %v255, 6.0
    %v272 = vmin.f32 %v256, 6.0
    %v273 = vmin.f32 %v257, 6.0
    %v274 = vmin.f32 %v258, 6.0
    %v275 = vmin.f32 %v259, 6.0
    %s276 = scalar_lea.vmem [#allocation2], 512
    %v277 = vld [vmem:[%s276] sm:$0xff]
    %v278 = vld [vmem:[%s276 + $0x8] sm:$0xff]
    %v279 = vld [vmem:[%s276 + $0x10] sm:$0xff]
    %v280 = vld [vmem:[%s276 + $0x18] sm:$0xff]
    %v281 = vld [vmem:[%s276 + $0x20] sm:$0xff]
    %v282 = vld [vmem:[%s276 + $0x28] sm:$0xff]
    %v283 = vld [vmem:[%s276 + $0x30] sm:$0xff]
    %v284 = vld [vmem:[%s276 + $0x38] sm:$0xff]
    %v285 = vld [vmem:[%s276 + $0x40] sm:$0xff]
    %v286 = vld [vmem:[%s276 + $0x48] sm:$0xff]
    %v287 = vld [vmem:[%s276 + $0x50] sm:$0xff]
    %v288 = vld [vmem:[%s276 + $0x58] sm:$0xff]
    %v289 = vld [vmem:[%s276 + $0x60] sm:$0xff]
    %v290 = vld [vmem:[%s276 + $0x68] sm:$0xff]
    %v291 = vld [vmem:[%s276 + $0x70] sm:$0xff]
    %v292 = vld [vmem:[%s276 + $0x78] sm:$0xff]
    %v293 = vmul.f32 %v260, %v277
    %v294 = vmul.f32 %v261, %v278
    %v295 = vmul.f32 %v262, %v279
    %v296 = vmul.f32 %v263, %v280
    %v297 = vmul.f32 %v264, %v281
    %v298 = vmul.f32 %v265, %v282
    %v299 = vmul.f32 %v266, %v283
    %v300 = vmul.f32 %v267, %v284
    %v301 = vmul.f32 %v268, %v285
    %v302 = vmul.f32 %v269, %v286
    %v303 = vmul.f32 %v270, %v287
    %v304 = vmul.f32 %v271, %v288
    %v305 = vmul.f32 %v272, %v289
    %v306 = vmul.f32 %v273, %v290
    %v307 = vmul.f32 %v274, %v291
    %v308 = vmul.f32 %v275, %v292
    %309 = vrot.lane.b32.xlu0 %v260, 17
    %v310 = vpop.permute.xlu0 %309
    %311 = vrot.lane.b32.xlu0 %v264, 17
    %v312 = vpop.permute.xlu0 %311
    %313 = vrot.lane.b32.xlu0 %v268, 17
    %v314 = vpop.permute.xlu0 %313
    %315 = vrot.lane.b32.xlu0 %v272, 17
    %v316 = vpop.permute.xlu0 %315
    %317 = vrot.lane.b32.xlu0 %v261, 17
    %v318 = vpop.permute.xlu0 %317
    %319 = vrot.lane.b32.xlu0 %v265, 17
    %v320 = vpop.permute.xlu0 %319
    %321 = vrot.lane.b32.xlu0 %v269, 17
    %v322 = vpop.permute.xlu0 %321
    %323 = vrot.lane.b32.xlu0 %v273, 17
    %v324 = vpop.permute.xlu0 %323
    %325 = vrot.lane.b32.xlu0 %v262, 17
    %v326 = vpop.permute.xlu0 %325
    %327 = vrot.lane.b32.xlu0 %v266, 17
    %v328 = vpop.permute.xlu0 %327
    %329 = vrot.lane.b32.xlu0 %v270, 17
    %v330 = vpop.permute.xlu0 %329
    %331 = vrot.lane.b32.xlu0 %v274, 17
    %v332 = vpop.permute.xlu0 %331
    %333 = vrot.lane.b32.xlu0 %v263, 17
    %v334 = vpop.permute.xlu0 %333
    %335 = vrot.lane.b32.xlu0 %v267, 17
    %v336 = vpop.permute.xlu0 %335
    %337 = vrot.lane.b32.xlu0 %v271, 17
    %v338 = vpop.permute.xlu0 %337
    %339 = vrot.lane.b32.xlu0 %v275, 17
    %v340 = vpop.permute.xlu0 %339
    %v341 = vlaneseq
    %v342 = vand.u32 %v341, 127
    %vm343 = vcmp.lt.s32.totalorder %v342, 17
    %v344 = vsel %vm343, %v326, %v334
    %v345 = vsel %vm343, %v328, %v336
    %v346 = vsel %vm343, %v330, %v338
    %v347 = vsel %vm343, %v332, %v340
    %v348 = vsel %vm343, %v318, %v326
    %v349 = vsel %vm343, %v320, %v328
    %v350 = vsel %vm343, %v322, %v330
    %v351 = vsel %vm343, %v324, %v332
    %v352 = vsel %vm343, %v310, %v318
    %v353 = vsel %vm343, %v312, %v320
    %v354 = vsel %vm343, %v314, %v322
    %v355 = vsel %vm343, %v316, %v324
    %v356 = vsel %vm343, %v334, %v310
    %v357 = vsel %vm343, %v336, %v312
    %v358 = vsel %vm343, %v338, %v314
    %v359 = vsel %vm343, %v340, %v316
    %v360 = vld [vmem:[#allocation2] sm:$0xff]
    %v361 = vld [vmem:[#allocation2 + $0x8] sm:$0xff]
    %v362 = vld [vmem:[#allocation2 + $0x10] sm:$0xff]
    %v363 = vld [vmem:[#allocation2 + $0x18] sm:$0xff]
    %v364 = vld [vmem:[#allocation2 + $0x20] sm:$0xff]
    %v365 = vld [vmem:[#allocation2 + $0x28] sm:$0xff]
    %v366 = vld [vmem:[#allocation2 + $0x30] sm:$0xff]
    %v367 = vld [vmem:[#allocation2 + $0x38] sm:$0xff]
    %v368 = vld [vmem:[#allocation2 + $0x40] sm:$0xff]
    %v369 = vld [vmem:[#allocation2 + $0x48] sm:$0xff]
    %v370 = vld [vmem:[#allocation2 + $0x50] sm:$0xff]
    %v371 = vld [vmem:[#allocation2 + $0x58] sm:$0xff]
    %v372 = vld [vmem:[#allocation2 + $0x60] sm:$0xff]
    %v373 = vld [vmem:[#allocation2 + $0x68] sm:$0xff]
    %v374 = vld [vmem:[#allocation2 + $0x70] sm:$0xff]
    %v375 = vld [vmem:[#allocation2 + $0x78] sm:$0xff]
    %v376 = vmul.f32 %v356, %v360
    %v377 = vmul.f32 %v352, %v361
    %v378 = vmul.f32 %v348, %v362
    %v379 = vmul.f32 %v344, %v363
    %v380 = vmul.f32 %v357, %v364
    %v381 = vmul.f32 %v353, %v365
    %v382 = vmul.f32 %v349, %v366
    %v383 = vmul.f32 %v345, %v367
    %v384 = vmul.f32 %v358, %v368
    %v385 = vmul.f32 %v354, %v369
    %v386 = vmul.f32 %v350, %v370
    %v387 = vmul.f32 %v346, %v371
    %v388 = vmul.f32 %v359, %v372
    %v389 = vmul.f32 %v355, %v373
    %v390 = vmul.f32 %v351, %v374
    %v391 = vmul.f32 %v347, %v375
    %v392 = vadd.f32 %v293, %v376
    %v393 = vadd.f32 %v294, %v377
    %v394 = vadd.f32 %v295, %v378
    %v395 = vadd.f32 %v296, %v379
    %v396 = vadd.f32 %v297, %v380
    %v397 = vadd.f32 %v298, %v381
    %v398 = vadd.f32 %v299, %v382
    %v399 = vadd.f32 %v300, %v383
    %v400 = vadd.f32 %v301, %v384
    %v401 = vadd.f32 %v302, %v385
    %v402 = vadd.f32 %v303, %v386
    %v403 = vadd.f32 %v304, %v387
    %v404 = vadd.f32 %v305, %v388
    %v405 = vadd.f32 %v306, %v389
    %v406 = vadd.f32 %v307, %v390
    %v407 = vadd.f32 %v308, %v391
    %408 = vrot.lane.b32.xlu0 %v260, 16
    %v409 = vpop.permute.xlu0 %408
    %410 = vrot.lane.b32.xlu0 %v264, 16
    %v411 = vpop.permute.xlu0 %410
    %412 = vrot.lane.b32.xlu0 %v268, 16
    %v413 = vpop.permute.xlu0 %412
    %414 = vrot.lane.b32.xlu0 %v272, 16
    %v415 = vpop.permute.xlu0 %414
    %416 = vrot.lane.b32.xlu0 %v261, 16
    %v417 = vpop.permute.xlu0 %416
    %418 = vrot.lane.b32.xlu0 %v265, 16
    %v419 = vpop.permute.xlu0 %418
    %420 = vrot.lane.b32.xlu0 %v269, 16
    %v421 = vpop.permute.xlu0 %420
    %422 = vrot.lane.b32.xlu0 %v273, 16
    %v423 = vpop.permute.xlu0 %422
    %424 = vrot.lane.b32.xlu0 %v262, 16
    %v425 = vpop.permute.xlu0 %424
    %426 = vrot.lane.b32.xlu0 %v266, 16
    %v427 = vpop.permute.xlu0 %426
    %428 = vrot.lane.b32.xlu0 %v270, 16
    %v429 = vpop.permute.xlu0 %428
    %430 = vrot.lane.b32.xlu0 %v274, 16
    %v431 = vpop.permute.xlu0 %430
    %432 = vrot.lane.b32.xlu0 %v263, 16
    %v433 = vpop.permute.xlu0 %432
    %434 = vrot.lane.b32.xlu0 %v267, 16
    %v435 = vpop.permute.xlu0 %434
    %436 = vrot.lane.b32.xlu0 %v271, 16
    %v437 = vpop.permute.xlu0 %436
    %438 = vrot.lane.b32.xlu0 %v275, 16
    %v439 = vpop.permute.xlu0 %438
    %vm440 = vcmp.lt.s32.totalorder %v342, 16
    %v441 = vsel %vm440, %v425, %v433
    %v442 = vsel %vm440, %v427, %v435
    %v443 = vsel %vm440, %v429, %v437
    %v444 = vsel %vm440, %v431, %v439
    %v445 = vsel %vm440, %v417, %v425
    %v446 = vsel %vm440, %v419, %v427
    %v447 = vsel %vm440, %v421, %v429
    %v448 = vsel %vm440, %v423, %v431
    %v449 = vsel %vm440, %v409, %v417
    %v450 = vsel %vm440, %v411, %v419
    %v451 = vsel %vm440, %v413, %v421
    %v452 = vsel %vm440, %v415, %v423
    %v453 = vsel %vm440, %v433, %v409
    %v454 = vsel %vm440, %v435, %v411
    %v455 = vsel %vm440, %v437, %v413
    %v456 = vsel %vm440, %v439, %v415
    %s457 = scalar_lea.vmem [#allocation2], 128
    %v458 = vld [vmem:[%s457] sm:$0xff]
    %v459 = vld [vmem:[%s457 + $0x8] sm:$0xff]
    %v460 = vld [vmem:[%s457 + $0x10] sm:$0xff]
    %v461 = vld [vmem:[%s457 + $0x18] sm:$0xff]
    %v462 = vld [vmem:[%s457 + $0x20] sm:$0xff]
    %v463 = vld [vmem:[%s457 + $0x28] sm:$0xff]
    %v464 = vld [vmem:[%s457 + $0x30] sm:$0xff]
    %v465 = vld [vmem:[%s457 + $0x38] sm:$0xff]
    %v466 = vld [vmem:[%s457 + $0x40] sm:$0xff]
    %v467 = vld [vmem:[%s457 + $0x48] sm:$0xff]
    %v468 = vld [vmem:[%s457 + $0x50] sm:$0xff]
    %v469 = vld [vmem:[%s457 + $0x58] sm:$0xff]
    %v470 = vld [vmem:[%s457 + $0x60] sm:$0xff]
    %v471 = vld [vmem:[%s457 + $0x68] sm:$0xff]
    %v472 = vld [vmem:[%s457 + $0x70] sm:$0xff]
    %v473 = vld [vmem:[%s457 + $0x78] sm:$0xff]
    %v474 = vmul.f32 %v453, %v458
    %v475 = vmul.f32 %v449, %v459
    %v476 = vmul.f32 %v445, %v460
    %v477 = vmul.f32 %v441, %v461
    %v478 = vmul.f32 %v454, %v462
    %v479 = vmul.f32 %v450, %v463
    %v480 = vmul.f32 %v446, %v464
    %v481 = vmul.f32 %v442, %v465
    %v482 = vmul.f32 %v455, %v466
    %v483 = vmul.f32 %v451, %v467
    %v484 = vmul.f32 %v447, %v468
    %v485 = vmul.f32 %v443, %v469
    %v486 = vmul.f32 %v456, %v470
    %v487 = vmul.f32 %v452, %v471
    %v488 = vmul.f32 %v448, %v472
    %v489 = vmul.f32 %v444, %v473
    %v490 = vadd.f32 %v392, %v474
    %v491 = vadd.f32 %v393, %v475
    %v492 = vadd.f32 %v394, %v476
    %v493 = vadd.f32 %v395, %v477
    %v494 = vadd.f32 %v396, %v478
    %v495 = vadd.f32 %v397, %v479
    %v496 = vadd.f32 %v398, %v480
    %v497 = vadd.f32 %v399, %v481
    %v498 = vadd.f32 %v400, %v482
    %v499 = vadd.f32 %v401, %v483
    %v500 = vadd.f32 %v402, %v484
    %v501 = vadd.f32 %v403, %v485
    %v502 = vadd.f32 %v404, %v486
    %v503 = vadd.f32 %v405, %v487
    %v504 = vadd.f32 %v406, %v488
    %v505 = vadd.f32 %v407, %v489
    %506 = vrot.lane.b32.xlu0 %v260, 15
    %v507 = vpop.permute.xlu0 %506
    %508 = vrot.lane.b32.xlu0 %v264, 15
    %v509 = vpop.permute.xlu0 %508
    %510 = vrot.lane.b32.xlu0 %v268, 15
    %v511 = vpop.permute.xlu0 %510
    %512 = vrot.lane.b32.xlu0 %v272, 15
    %v513 = vpop.permute.xlu0 %512
    %514 = vrot.lane.b32.xlu0 %v261, 15
    %v515 = vpop.permute.xlu0 %514
    %516 = vrot.lane.b32.xlu0 %v265, 15
    %v517 = vpop.permute.xlu0 %516
    %518 = vrot.lane.b32.xlu0 %v269, 15
    %v519 = vpop.permute.xlu0 %518
    %520 = vrot.lane.b32.xlu0 %v273, 15
    %v521 = vpop.permute.xlu0 %520
    %522 = vrot.lane.b32.xlu0 %v262, 15
    %v523 = vpop.permute.xlu0 %522
    %524 = vrot.lane.b32.xlu0 %v266, 15
    %v525 = vpop.permute.xlu0 %524
    %526 = vrot.lane.b32.xlu0 %v270, 15
    %v527 = vpop.permute.xlu0 %526
    %528 = vrot.lane.b32.xlu0 %v274, 15
    %v529 = vpop.permute.xlu0 %528
    %530 = vrot.lane.b32.xlu0 %v263, 15
    %v531 = vpop.permute.xlu0 %530
    %532 = vrot.lane.b32.xlu0 %v267, 15
    %v533 = vpop.permute.xlu0 %532
    %534 = vrot.lane.b32.xlu0 %v271, 15
    %v535 = vpop.permute.xlu0 %534
    %536 = vrot.lane.b32.xlu0 %v275, 15
    %v537 = vpop.permute.xlu0 %536
    %vm538 = vcmp.lt.s32.totalorder %v342, 15
    %v539 = vsel %vm538, %v523, %v531
    %v540 = vsel %vm538, %v525, %v533
    %v541 = vsel %vm538, %v527, %v535
    %v542 = vsel %vm538, %v529, %v537
    %v543 = vsel %vm538, %v515, %v523
    %v544 = vsel %vm538, %v517, %v525
    %v545 = vsel %vm538, %v519, %v527
    %v546 = vsel %vm538, %v521, %v529
    %v547 = vsel %vm538, %v507, %v515
    %v548 = vsel %vm538, %v509, %v517
    %v549 = vsel %vm538, %v511, %v519
    %v550 = vsel %vm538, %v513, %v521
    %v551 = vsel %vm538, %v531, %v507
    %v552 = vsel %vm538, %v533, %v509
    %v553 = vsel %vm538, %v535, %v511
    %v554 = vsel %vm538, %v537, %v513
    %s555 = scalar_lea.vmem [#allocation2], 256
    %v556 = vld [vmem:[%s555] sm:$0xff]
    %v557 = vld [vmem:[%s555 + $0x8] sm:$0xff]
    %v558 = vld [vmem:[%s555 + $0x10] sm:$0xff]
    %v559 = vld [vmem:[%s555 + $0x18] sm:$0xff]
    %v560 = vld [vmem:[%s555 + $0x20] sm:$0xff]
    %v561 = vld [vmem:[%s555 + $0x28] sm:$0xff]
    %v562 = vld [vmem:[%s555 + $0x30] sm:$0xff]
    %v563 = vld [vmem:[%s555 + $0x38] sm:$0xff]
    %v564 = vld [vmem:[%s555 + $0x40] sm:$0xff]
    %v565 = vld [vmem:[%s555 + $0x48] sm:$0xff]
    %v566 = vld [vmem:[%s555 + $0x50] sm:$0xff]
    %v567 = vld [vmem:[%s555 + $0x58] sm:$0xff]
    %v568 = vld [vmem:[%s555 + $0x60] sm:$0xff]
    %v569 = vld [vmem:[%s555 + $0x68] sm:$0xff]
    %v570 = vld [vmem:[%s555 + $0x70] sm:$0xff]
    %v571 = vld [vmem:[%s555 + $0x78] sm:$0xff]
    %v572 = vmul.f32 %v551, %v556
    %v573 = vmul.f32 %v547, %v557
    %v574 = vmul.f32 %v543, %v558
    %v575 = vmul.f32 %v539, %v559
    %v576 = vmul.f32 %v552, %v560
    %v577 = vmul.f32 %v548, %v561
    %v578 = vmul.f32 %v544, %v562
    %v579 = vmul.f32 %v540, %v563
    %v580 = vmul.f32 %v553, %v564
    %v581 = vmul.f32 %v549, %v565
    %v582 = vmul.f32 %v545, %v566
    %v583 = vmul.f32 %v541, %v567
    %v584 = vmul.f32 %v554, %v568
    %v585 = vmul.f32 %v550, %v569
    %v586 = vmul.f32 %v546, %v570
    %v587 = vmul.f32 %v542, %v571
    %v588 = vadd.f32 %v490, %v572
    %v589 = vadd.f32 %v491, %v573
    %v590 = vadd.f32 %v492, %v574
    %v591 = vadd.f32 %v493, %v575
    %v592 = vadd.f32 %v494, %v576
    %v593 = vadd.f32 %v495, %v577
    %v594 = vadd.f32 %v496, %v578
    %v595 = vadd.f32 %v497, %v579
    %v596 = vadd.f32 %v498, %v580
    %v597 = vadd.f32 %v499, %v581
    %v598 = vadd.f32 %v500, %v582
    %v599 = vadd.f32 %v501, %v583
    %v600 = vadd.f32 %v502, %v584
    %v601 = vadd.f32 %v503, %v585
    %v602 = vadd.f32 %v504, %v586
    %v603 = vadd.f32 %v505, %v587
    %604 = vrot.lane.b32.xlu0 %v260, 1
    %v605 = vpop.permute.xlu0 %604
    %606 = vrot.lane.b32.xlu0 %v264, 1
    %v607 = vpop.permute.xlu0 %606
    %608 = vrot.lane.b32.xlu0 %v268, 1
    %v609 = vpop.permute.xlu0 %608
    %610 = vrot.lane.b32.xlu0 %v272, 1
    %v611 = vpop.permute.xlu0 %610
    %612 = vrot.lane.b32.xlu0 %v261, 1
    %v613 = vpop.permute.xlu0 %612
    %614 = vrot.lane.b32.xlu0 %v265, 1
    %v615 = vpop.permute.xlu0 %614
    %616 = vrot.lane.b32.xlu0 %v269, 1
    %v617 = vpop.permute.xlu0 %616
    %618 = vrot.lane.b32.xlu0 %v273, 1
    %v619 = vpop.permute.xlu0 %618
    %620 = vrot.lane.b32.xlu0 %v262, 1
    %v621 = vpop.permute.xlu0 %620
    %622 = vrot.lane.b32.xlu0 %v266, 1
    %v623 = vpop.permute.xlu0 %622
    %624 = vrot.lane.b32.xlu0 %v270, 1
    %v625 = vpop.permute.xlu0 %624
    %626 = vrot.lane.b32.xlu0 %v274, 1
    %v627 = vpop.permute.xlu0 %626
    %628 = vrot.lane.b32.xlu0 %v263, 1
    %v629 = vpop.permute.xlu0 %628
    %630 = vrot.lane.b32.xlu0 %v267, 1
    %v631 = vpop.permute.xlu0 %630
    %632 = vrot.lane.b32.xlu0 %v271, 1
    %v633 = vpop.permute.xlu0 %632
    %634 = vrot.lane.b32.xlu0 %v275, 1
    %v635 = vpop.permute.xlu0 %634
    %vm636 = vcmp.lt.s32.totalorder %v342, 1
    %v637 = vsel %vm636, %v621, %v629
    %v638 = vsel %vm636, %v623, %v631
    %v639 = vsel %vm636, %v625, %v633
    %v640 = vsel %vm636, %v627, %v635
    %v641 = vsel %vm636, %v613, %v621
    %v642 = vsel %vm636, %v615, %v623
    %v643 = vsel %vm636, %v617, %v625
    %v644 = vsel %vm636, %v619, %v627
    %v645 = vsel %vm636, %v605, %v613
    %v646 = vsel %vm636, %v607, %v615
    %v647 = vsel %vm636, %v609, %v617
    %v648 = vsel %vm636, %v611, %v619
    %v649 = vsel %vm636, %v629, %v605
    %v650 = vsel %vm636, %v631, %v607
    %v651 = vsel %vm636, %v633, %v609
    %v652 = vsel %vm636, %v635, %v611
    %s653 = scalar_lea.vmem [#allocation2], 384
    %v654 = vld [vmem:[%s653] sm:$0xff]
    %v655 = vld [vmem:[%s653 + $0x8] sm:$0xff]
    %v656 = vld [vmem:[%s653 + $0x10] sm:$0xff]
    %v657 = vld [vmem:[%s653 + $0x18] sm:$0xff]
    %v658 = vld [vmem:[%s653 + $0x20] sm:$0xff]
    %v659 = vld [vmem:[%s653 + $0x28] sm:$0xff]
    %v660 = vld [vmem:[%s653 + $0x30] sm:$0xff]
    %v661 = vld [vmem:[%s653 + $0x38] sm:$0xff]
    %v662 = vld [vmem:[%s653 + $0x40] sm:$0xff]
    %v663 = vld [vmem:[%s653 + $0x48] sm:$0xff]
    %v664 = vld [vmem:[%s653 + $0x50] sm:$0xff]
    %v665 = vld [vmem:[%s653 + $0x58] sm:$0xff]
    %v666 = vld [vmem:[%s653 + $0x60] sm:$0xff]
    %v667 = vld [vmem:[%s653 + $0x68] sm:$0xff]
    %v668 = vld [vmem:[%s653 + $0x70] sm:$0xff]
    %v669 = vld [vmem:[%s653 + $0x78] sm:$0xff]
    %v670 = vmul.f32 %v649, %v654
    %v671 = vmul.f32 %v645, %v655
    %v672 = vmul.f32 %v641, %v656
    %v673 = vmul.f32 %v637, %v657
    %v674 = vmul.f32 %v650, %v658
    %v675 = vmul.f32 %v646, %v659
    %v676 = vmul.f32 %v642, %v660
    %v677 = vmul.f32 %v638, %v661
    %v678 = vmul.f32 %v651, %v662
    %v679 = vmul.f32 %v647, %v663
    %v680 = vmul.f32 %v643, %v664
    %v681 = vmul.f32 %v639, %v665
    %v682 = vmul.f32 %v652, %v666
    %v683 = vmul.f32 %v648, %v667
    %v684 = vmul.f32 %v644, %v668
    %v685 = vmul.f32 %v640, %v669
    %v686 = vadd.f32 %v588, %v670
    %v687 = vadd.f32 %v589, %v671
    %v688 = vadd.f32 %v590, %v672
    %v689 = vadd.f32 %v591, %v673
    %v690 = vadd.f32 %v592, %v674
    %v691 = vadd.f32 %v593, %v675
    %v692 = vadd.f32 %v594, %v676
    %v693 = vadd.f32 %v595, %v677
    %v694 = vadd.f32 %v596, %v678
    %v695 = vadd.f32 %v597, %v679
    %v696 = vadd.f32 %v598, %v680
    %v697 = vadd.f32 %v599, %v681
    %v698 = vadd.f32 %v600, %v682
    %v699 = vadd.f32 %v601, %v683
    %v700 = vadd.f32 %v602, %v684
    %v701 = vadd.f32 %v603, %v685
    %702 = vrot.lane.b32.xlu0 %v260, 127
    %v703 = vpop.permute.xlu0 %702
    %704 = vrot.lane.b32.xlu0 %v264, 127
    %v705 = vpop.permute.xlu0 %704
    %706 = vrot.lane.b32.xlu0 %v268, 127
    %v707 = vpop.permute.xlu0 %706
    %708 = vrot.lane.b32.xlu0 %v272, 127
    %v709 = vpop.permute.xlu0 %708
    %710 = vrot.lane.b32.xlu0 %v261, 127
    %v711 = vpop.permute.xlu0 %710
    %712 = vrot.lane.b32.xlu0 %v265, 127
    %v713 = vpop.permute.xlu0 %712
    %714 = vrot.lane.b32.xlu0 %v269, 127
    %v715 = vpop.permute.xlu0 %714
    %716 = vrot.lane.b32.xlu0 %v273, 127
    %v717 = vpop.permute.xlu0 %716
    %718 = vrot.lane.b32.xlu0 %v262, 127
    %v719 = vpop.permute.xlu0 %718
    %720 = vrot.lane.b32.xlu0 %v266, 127
    %v721 = vpop.permute.xlu0 %720
    %722 = vrot.lane.b32.xlu0 %v270, 127
    %v723 = vpop.permute.xlu0 %722
    %724 = vrot.lane.b32.xlu0 %v274, 127
    %v725 = vpop.permute.xlu0 %724
    %726 = vrot.lane.b32.xlu0 %v263, 127
    %v727 = vpop.permute.xlu0 %726
    %728 = vrot.lane.b32.xlu0 %v267, 127
    %v729 = vpop.permute.xlu0 %728
    %730 = vrot.lane.b32.xlu0 %v271, 127
    %v731 = vpop.permute.xlu0 %730
    %732 = vrot.lane.b32.xlu0 %v275, 127
    %v733 = vpop.permute.xlu0 %732
    %vm734 = vcmp.lt.s32.totalorder %v342, 127
    %v735 = vsel %vm734, %v719, %v727
    %v736 = vsel %vm734, %v721, %v729
    %v737 = vsel %vm734, %v723, %v731
    %v738 = vsel %vm734, %v725, %v733
    %v739 = vsel %vm734, %v711, %v719
    %v740 = vsel %vm734, %v713, %v721
    %v741 = vsel %vm734, %v715, %v723
    %v742 = vsel %vm734, %v717, %v725
    %v743 = vsel %vm734, %v703, %v711
    %v744 = vsel %vm734, %v705, %v713
    %v745 = vsel %vm734, %v707, %v715
    %v746 = vsel %vm734, %v709, %v717
    %v747 = vsel %vm734, %v727, %v703
    %v748 = vsel %vm734, %v729, %v705
    %v749 = vsel %vm734, %v731, %v707
    %v750 = vsel %vm734, %v733, %v709
    %s751 = scalar_lea.vmem [#allocation2], 640
    %v752 = vld [vmem:[%s751] sm:$0xff]
    %v753 = vld [vmem:[%s751 + $0x8] sm:$0xff]
    %v754 = vld [vmem:[%s751 + $0x10] sm:$0xff]
    %v755 = vld [vmem:[%s751 + $0x18] sm:$0xff]
    %v756 = vld [vmem:[%s751 + $0x20] sm:$0xff]
    %v757 = vld [vmem:[%s751 + $0x28] sm:$0xff]
    %v758 = vld [vmem:[%s751 + $0x30] sm:$0xff]
    %v759 = vld [vmem:[%s751 + $0x38] sm:$0xff]
    %v760 = vld [vmem:[%s751 + $0x40] sm:$0xff]
    %v761 = vld [vmem:[%s751 + $0x48] sm:$0xff]
    %v762 = vld [vmem:[%s751 + $0x50] sm:$0xff]
    %v763 = vld [vmem:[%s751 + $0x58] sm:$0xff]
    %v764 = vld [vmem:[%s751 + $0x60] sm:$0xff]
    %v765 = vld [vmem:[%s751 + $0x68] sm:$0xff]
    %v766 = vld [vmem:[%s751 + $0x70] sm:$0xff]
    %v767 = vld [vmem:[%s751 + $0x78] sm:$0xff]
    %v768 = vmul.f32 %v743, %v752
    %v769 = vmul.f32 %v739, %v753
    %v770 = vmul.f32 %v735, %v754
    %v771 = vmul.f32 %v747, %v755
    %v772 = vmul.f32 %v744, %v756
    %v773 = vmul.f32 %v740, %v757
    %v774 = vmul.f32 %v736, %v758
    %v775 = vmul.f32 %v748, %v759
    %v776 = vmul.f32 %v745, %v760
    %v777 = vmul.f32 %v741, %v761
    %v778 = vmul.f32 %v737, %v762
    %v779 = vmul.f32 %v749, %v763
    %v780 = vmul.f32 %v746, %v764
    %v781 = vmul.f32 %v742, %v765
    %v782 = vmul.f32 %v738, %v766
    %v783 = vmul.f32 %v750, %v767
    %v784 = vadd.f32 %v686, %v768
    %v785 = vadd.f32 %v687, %v769
    %v786 = vadd.f32 %v688, %v770
    %v787 = vadd.f32 %v689, %v771
    %v788 = vadd.f32 %v690, %v772
    %v789 = vadd.f32 %v691, %v773
    %v790 = vadd.f32 %v692, %v774
    %v791 = vadd.f32 %v693, %v775
    %v792 = vadd.f32 %v694, %v776
    %v793 = vadd.f32 %v695, %v777
    %v794 = vadd.f32 %v696, %v778
    %v795 = vadd.f32 %v697, %v779
    %v796 = vadd.f32 %v698, %v780
    %v797 = vadd.f32 %v699, %v781
    %v798 = vadd.f32 %v700, %v782
    %v799 = vadd.f32 %v701, %v783
    %800 = vrot.lane.b32.xlu0 %v260, 113
    %v801 = vpop.permute.xlu0 %800
    %802 = vrot.lane.b32.xlu0 %v264, 113
    %v803 = vpop.permute.xlu0 %802
    %804 = vrot.lane.b32.xlu0 %v268, 113
    %v805 = vpop.permute.xlu0 %804
    %806 = vrot.lane.b32.xlu0 %v272, 113
    %v807 = vpop.permute.xlu0 %806
    %808 = vrot.lane.b32.xlu0 %v261, 113
    %v809 = vpop.permute.xlu0 %808
    %810 = vrot.lane.b32.xlu0 %v265, 113
    %v811 = vpop.permute.xlu0 %810
    %812 = vrot.lane.b32.xlu0 %v269, 113
    %v813 = vpop.permute.xlu0 %812
    %814 = vrot.lane.b32.xlu0 %v273, 113
    %v815 = vpop.permute.xlu0 %814
    %816 = vrot.lane.b32.xlu0 %v262, 113
    %v817 = vpop.permute.xlu0 %816
    %818 = vrot.lane.b32.xlu0 %v266, 113
    %v819 = vpop.permute.xlu0 %818
    %820 = vrot.lane.b32.xlu0 %v270, 113
    %v821 = vpop.permute.xlu0 %820
    %822 = vrot.lane.b32.xlu0 %v274, 113
    %v823 = vpop.permute.xlu0 %822
    %824 = vrot.lane.b32.xlu0 %v263, 113
    %v825 = vpop.permute.xlu0 %824
    %826 = vrot.lane.b32.xlu0 %v267, 113
    %v827 = vpop.permute.xlu0 %826
    %828 = vrot.lane.b32.xlu0 %v271, 113
    %v829 = vpop.permute.xlu0 %828
    %830 = vrot.lane.b32.xlu0 %v275, 113
    %v831 = vpop.permute.xlu0 %830
    %vm832 = vcmp.lt.s32.totalorder %v342, 113
    %v833 = vsel %vm832, %v817, %v825
    %v834 = vsel %vm832, %v819, %v827
    %v835 = vsel %vm832, %v821, %v829
    %v836 = vsel %vm832, %v823, %v831
    %v837 = vsel %vm832, %v809, %v817
    %v838 = vsel %vm832, %v811, %v819
    %v839 = vsel %vm832, %v813, %v821
    %v840 = vsel %vm832, %v815, %v823
    %v841 = vsel %vm832, %v801, %v809
    %v842 = vsel %vm832, %v803, %v811
    %v843 = vsel %vm832, %v805, %v813
    %v844 = vsel %vm832, %v807, %v815
    %v845 = vsel %vm832, %v825, %v801
    %v846 = vsel %vm832, %v827, %v803
    %v847 = vsel %vm832, %v829, %v805
    %v848 = vsel %vm832, %v831, %v807
    %s849 = scalar_lea.vmem [#allocation2], 768
    %v850 = vld [vmem:[%s849] sm:$0xff]
    %v851 = vld [vmem:[%s849 + $0x8] sm:$0xff]
    %v852 = vld [vmem:[%s849 + $0x10] sm:$0xff]
    %v853 = vld [vmem:[%s849 + $0x18] sm:$0xff]
    %v854 = vld [vmem:[%s849 + $0x20] sm:$0xff]
    %v855 = vld [vmem:[%s849 + $0x28] sm:$0xff]
    %v856 = vld [vmem:[%s849 + $0x30] sm:$0xff]
    %v857 = vld [vmem:[%s849 + $0x38] sm:$0xff]
    %v858 = vld [vmem:[%s849 + $0x40] sm:$0xff]
    %v859 = vld [vmem:[%s849 + $0x48] sm:$0xff]
    %v860 = vld [vmem:[%s849 + $0x50] sm:$0xff]
    %v861 = vld [vmem:[%s849 + $0x58] sm:$0xff]
    %v862 = vld [vmem:[%s849 + $0x60] sm:$0xff]
    %v863 = vld [vmem:[%s849 + $0x68] sm:$0xff]
    %v864 = vld [vmem:[%s849 + $0x70] sm:$0xff]
    %v865 = vld [vmem:[%s849 + $0x78] sm:$0xff]
    %v866 = vmul.f32 %v841, %v850
    %v867 = vmul.f32 %v837, %v851
    %v868 = vmul.f32 %v833, %v852
    %v869 = vmul.f32 %v845, %v853
    %v870 = vmul.f32 %v842, %v854
    %v871 = vmul.f32 %v838, %v855
    %v872 = vmul.f32 %v834, %v856
    %v873 = vmul.f32 %v846, %v857
    %v874 = vmul.f32 %v843, %v858
    %v875 = vmul.f32 %v839, %v859
    %v876 = vmul.f32 %v835, %v860
    %v877 = vmul.f32 %v847, %v861
    %v878 = vmul.f32 %v844, %v862
    %v879 = vmul.f32 %v840, %v863
    %v880 = vmul.f32 %v836, %v864
    %v881 = vmul.f32 %v848, %v865
    %v882 = vadd.f32 %v784, %v866
    %v883 = vadd.f32 %v785, %v867
    %v884 = vadd.f32 %v786, %v868
    %v885 = vadd.f32 %v787, %v869
    %v886 = vadd.f32 %v788, %v870
    %v887 = vadd.f32 %v789, %v871
    %v888 = vadd.f32 %v790, %v872
    %v889 = vadd.f32 %v791, %v873
    %v890 = vadd.f32 %v792, %v874
    %v891 = vadd.f32 %v793, %v875
    %v892 = vadd.f32 %v794, %v876
    %v893 = vadd.f32 %v795, %v877
    %v894 = vadd.f32 %v796, %v878
    %v895 = vadd.f32 %v797, %v879
    %v896 = vadd.f32 %v798, %v880
    %v897 = vadd.f32 %v799, %v881
    %898 = vrot.lane.b32.xlu0 %v260, 112
    %v899 = vpop.permute.xlu0 %898
    %900 = vrot.lane.b32.xlu0 %v264, 112
    %v901 = vpop.permute.xlu0 %900
    %902 = vrot.lane.b32.xlu0 %v268, 112
    %v903 = vpop.permute.xlu0 %902
    %904 = vrot.lane.b32.xlu0 %v272, 112
    %v905 = vpop.permute.xlu0 %904
    %906 = vrot.lane.b32.xlu0 %v261, 112
    %v907 = vpop.permute.xlu0 %906
    %908 = vrot.lane.b32.xlu0 %v265, 112
    %v909 = vpop.permute.xlu0 %908
    %910 = vrot.lane.b32.xlu0 %v269, 112
    %v911 = vpop.permute.xlu0 %910
    %912 = vrot.lane.b32.xlu0 %v273, 112
    %v913 = vpop.permute.xlu0 %912
    %914 = vrot.lane.b32.xlu0 %v262, 112
    %v915 = vpop.permute.xlu0 %914
    %916 = vrot.lane.b32.xlu0 %v266, 112
    %v917 = vpop.permute.xlu0 %916
    %918 = vrot.lane.b32.xlu0 %v270, 112
    %v919 = vpop.permute.xlu0 %918
    %920 = vrot.lane.b32.xlu0 %v274, 112
    %v921 = vpop.permute.xlu0 %920
    %922 = vrot.lane.b32.xlu0 %v263, 112
    %v923 = vpop.permute.xlu0 %922
    %924 = vrot.lane.b32.xlu0 %v267, 112
    %v925 = vpop.permute.xlu0 %924
    %926 = vrot.lane.b32.xlu0 %v271, 112
    %v927 = vpop.permute.xlu0 %926
    %928 = vrot.lane.b32.xlu0 %v275, 112
    %v929 = vpop.permute.xlu0 %928
    %vm930 = vcmp.lt.s32.totalorder %v342, 112
    %v931 = vsel %vm930, %v915, %v923
    %v932 = vsel %vm930, %v917, %v925
    %v933 = vsel %vm930, %v919, %v927
    %v934 = vsel %vm930, %v921, %v929
    %v935 = vsel %vm930, %v907, %v915
    %v936 = vsel %vm930, %v909, %v917
    %v937 = vsel %vm930, %v911, %v919
    %v938 = vsel %vm930, %v913, %v921
    %v939 = vsel %vm930, %v899, %v907
    %v940 = vsel %vm930, %v901, %v909
    %v941 = vsel %vm930, %v903, %v911
    %v942 = vsel %vm930, %v905, %v913
    %v943 = vsel %vm930, %v923, %v899
    %v944 = vsel %vm930, %v925, %v901
    %v945 = vsel %vm930, %v927, %v903
    %v946 = vsel %vm930, %v929, %v905
    %s947 = scalar_lea.vmem [#allocation2], 896
    %v948 = vld [vmem:[%s947] sm:$0xff]
    %v949 = vld [vmem:[%s947 + $0x8] sm:$0xff]
    %v950 = vld [vmem:[%s947 + $0x10] sm:$0xff]
    %v951 = vld [vmem:[%s947 + $0x18] sm:$0xff]
    %v952 = vld [vmem:[%s947 + $0x20] sm:$0xff]
    %v953 = vld [vmem:[%s947 + $0x28] sm:$0xff]
    %v954 = vld [vmem:[%s947 + $0x30] sm:$0xff]
    %v955 = vld [vmem:[%s947 + $0x38] sm:$0xff]
    %v956 = vld [vmem:[%s947 + $0x40] sm:$0xff]
    %v957 = vld [vmem:[%s947 + $0x48] sm:$0xff]
    %v958 = vld [vmem:[%s947 + $0x50] sm:$0xff]
    %v959 = vld [vmem:[%s947 + $0x58] sm:$0xff]
    %v960 = vld [vmem:[%s947 + $0x60] sm:$0xff]
    %v961 = vld [vmem:[%s947 + $0x68] sm:$0xff]
    %v962 = vld [vmem:[%s947 + $0x70] sm:$0xff]
    %v963 = vld [vmem:[%s947 + $0x78] sm:$0xff]
    %v964 = vmul.f32 %v939, %v948
    %v965 = vmul.f32 %v935, %v949
    %v966 = vmul.f32 %v931, %v950
    %v967 = vmul.f32 %v943, %v951
    %v968 = vmul.f32 %v940, %v952
    %v969 = vmul.f32 %v936, %v953
    %v970 = vmul.f32 %v932, %v954
    %v971 = vmul.f32 %v944, %v955
    %v972 = vmul.f32 %v941, %v956
    %v973 = vmul.f32 %v937, %v957
    %v974 = vmul.f32 %v933, %v958
    %v975 = vmul.f32 %v945, %v959
    %v976 = vmul.f32 %v942, %v960
    %v977 = vmul.f32 %v938, %v961
    %v978 = vmul.f32 %v934, %v962
    %v979 = vmul.f32 %v946, %v963
    %v980 = vadd.f32 %v882, %v964
    %v981 = vadd.f32 %v883, %v965
    %v982 = vadd.f32 %v884, %v966
    %v983 = vadd.f32 %v885, %v967
    %v984 = vadd.f32 %v886, %v968
    %v985 = vadd.f32 %v887, %v969
    %v986 = vadd.f32 %v888, %v970
    %v987 = vadd.f32 %v889, %v971
    %v988 = vadd.f32 %v890, %v972
    %v989 = vadd.f32 %v891, %v973
    %v990 = vadd.f32 %v892, %v974
    %v991 = vadd.f32 %v893, %v975
    %v992 = vadd.f32 %v894, %v976
    %v993 = vadd.f32 %v895, %v977
    %v994 = vadd.f32 %v896, %v978
    %v995 = vadd.f32 %v897, %v979
    %996 = vrot.lane.b32.xlu0 %v260, 111
    %v997 = vpop.permute.xlu0 %996
    %998 = vrot.lane.b32.xlu0 %v264, 111
    %v999 = vpop.permute.xlu0 %998
    %1000 = vrot.lane.b32.xlu0 %v268, 111
    %v1001 = vpop.permute.xlu0 %1000
    %1002 = vrot.lane.b32.xlu0 %v272, 111
    %v1003 = vpop.permute.xlu0 %1002
    %1004 = vrot.lane.b32.xlu0 %v261, 111
    %v1005 = vpop.permute.xlu0 %1004
    %1006 = vrot.lane.b32.xlu0 %v265, 111
    %v1007 = vpop.permute.xlu0 %1006
    %1008 = vrot.lane.b32.xlu0 %v269, 111
    %v1009 = vpop.permute.xlu0 %1008
    %1010 = vrot.lane.b32.xlu0 %v273, 111
    %v1011 = vpop.permute.xlu0 %1010
    %1012 = vrot.lane.b32.xlu0 %v262, 111
    %v1013 = vpop.permute.xlu0 %1012
    %1014 = vrot.lane.b32.xlu0 %v266, 111
    %v1015 = vpop.permute.xlu0 %1014
    %1016 = vrot.lane.b32.xlu0 %v270, 111
    %v1017 = vpop.permute.xlu0 %1016
    %1018 = vrot.lane.b32.xlu0 %v274, 111
    %v1019 = vpop.permute.xlu0 %1018
    %1020 = vrot.lane.b32.xlu0 %v263, 111
    %v1021 = vpop.permute.xlu0 %1020
    %1022 = vrot.lane.b32.xlu0 %v267, 111
    %v1023 = vpop.permute.xlu0 %1022
    %1024 = vrot.lane.b32.xlu0 %v271, 111
    %v1025 = vpop.permute.xlu0 %1024
    %1026 = vrot.lane.b32.xlu0 %v275, 111
    %v1027 = vpop.permute.xlu0 %1026
    %vm1028 = vcmp.lt.s32.totalorder %v342, 111
    %v1029 = vsel %vm1028, %v1013, %v1021
    %v1030 = vsel %vm1028, %v1015, %v1023
    %v1031 = vsel %vm1028, %v1017, %v1025
    %v1032 = vsel %vm1028, %v1019, %v1027
    %v1033 = vsel %vm1028, %v1005, %v1013
    %v1034 = vsel %vm1028, %v1007, %v1015
    %v1035 = vsel %vm1028, %v1009, %v1017
    %v1036 = vsel %vm1028, %v1011, %v1019
    %v1037 = vsel %vm1028, %v997, %v1005
    %v1038 = vsel %vm1028, %v999, %v1007
    %v1039 = vsel %vm1028, %v1001, %v1009
    %v1040 = vsel %vm1028, %v1003, %v1011
    %v1041 = vsel %vm1028, %v1021, %v997
    %v1042 = vsel %vm1028, %v1023, %v999
    %v1043 = vsel %vm1028, %v1025, %v1001
    %v1044 = vsel %vm1028, %v1027, %v1003
    %s1045 = scalar_lea.vmem [#allocation2], 1024
    %v1046 = vld [vmem:[%s1045] sm:$0xff]
    %v1047 = vld [vmem:[%s1045 + $0x8] sm:$0xff]
    %v1048 = vld [vmem:[%s1045 + $0x10] sm:$0xff]
    %v1049 = vld [vmem:[%s1045 + $0x18] sm:$0xff]
    %v1050 = vld [vmem:[%s1045 + $0x20] sm:$0xff]
    %v1051 = vld [vmem:[%s1045 + $0x28] sm:$0xff]
    %v1052 = vld [vmem:[%s1045 + $0x30] sm:$0xff]
    %v1053 = vld [vmem:[%s1045 + $0x38] sm:$0xff]
    %v1054 = vld [vmem:[%s1045 + $0x40] sm:$0xff]
    %v1055 = vld [vmem:[%s1045 + $0x48] sm:$0xff]
    %v1056 = vld [vmem:[%s1045 + $0x50] sm:$0xff]
    %v1057 = vld [vmem:[%s1045 + $0x58] sm:$0xff]
    %v1058 = vld [vmem:[%s1045 + $0x60] sm:$0xff]
    %v1059 = vld [vmem:[%s1045 + $0x68] sm:$0xff]
    %v1060 = vld [vmem:[%s1045 + $0x70] sm:$0xff]
    %v1061 = vld [vmem:[%s1045 + $0x78] sm:$0xff]
    %v1062 = vmul.f32 %v1037, %v1046
    %v1063 = vmul.f32 %v1033, %v1047
    %v1064 = vmul.f32 %v1029, %v1048
    %v1065 = vmul.f32 %v1041, %v1049
    %v1066 = vmul.f32 %v1038, %v1050
    %v1067 = vmul.f32 %v1034, %v1051
    %v1068 = vmul.f32 %v1030, %v1052
    %v1069 = vmul.f32 %v1042, %v1053
    %v1070 = vmul.f32 %v1039, %v1054
    %v1071 = vmul.f32 %v1035, %v1055
    %v1072 = vmul.f32 %v1031, %v1056
    %v1073 = vmul.f32 %v1043, %v1057
    %v1074 = vmul.f32 %v1040, %v1058
    %v1075 = vmul.f32 %v1036, %v1059
    %v1076 = vmul.f32 %v1032, %v1060
    %v1077 = vmul.f32 %v1044, %v1061
    %v1078 = vadd.f32 %v980, %v1062
    %v1079 = vadd.f32 %v981, %v1063
    %v1080 = vadd.f32 %v982, %v1064
    %v1081 = vadd.f32 %v983, %v1065
    %v1082 = vadd.f32 %v984, %v1066
    %v1083 = vadd.f32 %v985, %v1067
    %v1084 = vadd.f32 %v986, %v1068
    %v1085 = vadd.f32 %v987, %v1069
    %v1086 = vadd.f32 %v988, %v1070
    %v1087 = vadd.f32 %v989, %v1071
    %v1088 = vadd.f32 %v990, %v1072
    %v1089 = vadd.f32 %v991, %v1073
    %v1090 = vadd.f32 %v992, %v1074
    %v1091 = vadd.f32 %v993, %v1075
    %v1092 = vadd.f32 %v994, %v1076
    %v1093 = vadd.f32 %v995, %v1077
    %1094 = vset.pattern.permute.xlu0 9
    %1095 = vperm.xlu0 %1094, %v33
    %v1096 = vpop.permute.xlu0 %1095
    %1098 = vset.pattern.permute.xlu0 9
    %1099 = vperm.xlu0 %1098, %v34
    %v1100 = vpop.permute.xlu0 %1099
    %1102 = vset.pattern.permute.xlu0 9
    %1103 = vperm.xlu0 %1102, %v35
    %v1104 = vpop.permute.xlu0 %1103
    %1106 = vset.pattern.permute.xlu0 9
    %1107 = vperm.xlu0 %1106, %v36
    %v1108 = vpop.permute.xlu0 %1107
    %v1110 = vadd.f32 %v1078, %v1096
    %v1111 = vadd.f32 %v1079, %v1096
    %v1112 = vadd.f32 %v1080, %v1096
    %v1113 = vadd.f32 %v1081, %v1096
    %v1114 = vadd.f32 %v1082, %v1100
    %v1115 = vadd.f32 %v1083, %v1100
    %v1116 = vadd.f32 %v1084, %v1100
    %v1117 = vadd.f32 %v1085, %v1100
    %v1118 = vadd.f32 %v1086, %v1104
    %v1119 = vadd.f32 %v1087, %v1104
    %v1120 = vadd.f32 %v1088, %v1104
    %v1121 = vadd.f32 %v1089, %v1104
    %v1122 = vadd.f32 %v1090, %v1108
    %v1123 = vadd.f32 %v1091, %v1108
    %v1124 = vadd.f32 %v1092, %v1108
    %v1125 = vadd.f32 %v1093, %v1108
    %v1126 = vmax.f32 %v1110, 0.0
    %v1127 = vmax.f32 %v1111, 0.0
    %v1128 = vmax.f32 %v1112, 0.0
    %v1129 = vmax.f32 %v1113, 0.0
    %v1130 = vmax.f32 %v1114, 0.0
    %v1131 = vmax.f32 %v1115, 0.0
    %v1132 = vmax.f32 %v1116, 0.0
    %v1133 = vmax.f32 %v1117, 0.0
    %v1134 = vmax.f32 %v1118, 0.0
    %v1135 = vmax.f32 %v1119, 0.0
    %v1136 = vmax.f32 %v1120, 0.0
    %v1137 = vmax.f32 %v1121, 0.0
    %v1138 = vmax.f32 %v1122, 0.0
    %v1139 = vmax.f32 %v1123, 0.0
    %v1140 = vmax.f32 %v1124, 0.0
    %v1141 = vmax.f32 %v1125, 0.0
    %v1142 = vmin.f32 %v1126, 6.0
    %v1143 = vmin.f32 %v1127, 6.0
    %v1144 = vmin.f32 %v1128, 6.0
    %v1145 = vmin.f32 %v1129, 6.0
    %v1146 = vmin.f32 %v1130, 6.0
    %v1147 = vmin.f32 %v1131, 6.0
    %v1148 = vmin.f32 %v1132, 6.0
    %v1149 = vmin.f32 %v1133, 6.0
    %v1150 = vmin.f32 %v1134, 6.0
    %v1151 = vmin.f32 %v1135, 6.0
    %v1152 = vmin.f32 %v1136, 6.0
    %v1153 = vmin.f32 %v1137, 6.0
    %v1154 = vmin.f32 %v1138, 6.0
    %v1155 = vmin.f32 %v1139, 6.0
    %v1156 = vmin.f32 %v1140, 6.0
    %v1157 = vmin.f32 %v1141, 6.0
    %1158 = vset.pattern.permute.xlu0 18
    %1159 = vperm.xlu0 %1158, %v33
    %v1160 = vpop.permute.xlu0 %1159
    %1162 = vrot.lane.b32.xlu0 %v33, 118
    %v1163 = vpop.permute.xlu0 %1162
    %1164 = vrot.lane.b32.xlu0 %v34, 118
    %v1165 = vpop.permute.xlu0 %1164
    %1166 = vrot.lane.b32.xlu0 %v35, 118
    %v1167 = vpop.permute.xlu0 %1166
    %1168 = vrot.lane.b32.xlu0 %v36, 118
    %v1169 = vpop.permute.xlu0 %1168
    %1174 = vxpose.xlu0.b32.start [1/16] %v1163, 128
    %1175 = vxpose.xlu0.b32.cont [2/16] %v1165, 128
    %1176 = vxpose.xlu0.b32.cont [3/16] %v1167, 128
    %1177 = vxpose.xlu0.b32.cont [4/16] %v1169, 128
    %1178 = vxpose.xlu0.b32.cont [5/16] 0.0, 128
    %1179 = vxpose.xlu0.b32.cont [6/16] 0.0, 128
    %1180 = vxpose.xlu0.b32.cont [7/16] 0.0, 128
    %1181 = vxpose.xlu0.b32.cont [8/16] 0.0, 128
    %1182 = vxpose.xlu0.b32.cont [9/16] 0.0, 128
    %1183 = vxpose.xlu0.b32.cont [10/16] 0.0, 128
    %1184 = vxpose.xlu0.b32.cont [11/16] 0.0, 128
    %1185 = vxpose.xlu0.b32.cont [12/16] 0.0, 128
    %1186 = vxpose.xlu0.b32.cont [13/16] 0.0, 128
    %1187 = vxpose.xlu0.b32.cont [14/16] 0.0, 128
    %1188 = vxpose.xlu0.b32.cont [15/16] 0.0, 128
    %1189 = vxpose.xlu0.b32.end [16/16] 0.0, 128
    %v1190 = vpop.trf.xlu0
    %v1191 = vpop.trf.xlu0
    %v1192 = vpop.trf.xlu0
    %v1193 = vpop.trf.xlu0
    %v1194 = vpop.trf.xlu0
    %v1195 = vpop.trf.xlu0
    %v1196 = vpop.trf.xlu0
    %v1197 = vpop.trf.xlu0
    %v1198 = vpop.trf.xlu0
    %v1199 = vpop.trf.xlu0
    %v1200 = vpop.trf.xlu0
    %v1201 = vpop.trf.xlu0
    %v1202 = vpop.trf.xlu0
    %v1203 = vpop.trf.xlu0
    %v1204 = vpop.trf.xlu0
    %v1205 = vpop.trf.xlu0
    %vm1206 = vcmask 261120
    %v1208 = vsel %vm1206, %v1190, 0
    %1210 = vmatprep.subr.mxu0 %v1143
    %1211 = vmatpush1.msra.mxu0 %v1142
    %1212 = vmatprep.subr.mxu0 %v1147
    %1213 = vmatpush1.msra.mxu0 %v1146
    %1214 = vmatprep.subr.mxu0 %v1151
    %1215 = vmatpush1.msra.mxu0 %v1150
    %1216 = vmatprep.subr.mxu0 %v1155
    %1217 = vmatpush1.msra.mxu0 %v1154
    %1218 = vmatprep.subr.mxu0 0.0
    %1219 = vmatpush1.msra.mxu0 0.0
    %1220 = vmatprep.subr.mxu0 0.0
    %1221 = vmatpush1.msra.mxu0 0.0
    %1222 = vmatprep.subr.mxu0 0.0
    %1223 = vmatpush1.msra.mxu0 0.0
    %1224 = vmatprep.subr.mxu0 0.0
    %1225 = vmatpush1.msra.mxu0 0.0
    %1226 = vmatprep.subr.mxu0 0.0
    %1227 = vmatpush1.msra.mxu0 0.0
    %1228 = vmatprep.subr.mxu0 0.0
    %1229 = vmatpush1.msra.mxu0 0.0
    %1230 = vmatprep.subr.mxu0 0.0
    %1231 = vmatpush1.msra.mxu0 0.0
    %1232 = vmatprep.subr.mxu0 0.0
    %1233 = vmatpush1.msra.mxu0 0.0
    %1234 = vmatprep.subr.mxu0 0.0
    %1235 = vmatpush1.msra.mxu0 0.0
    %1236 = vmatprep.subr.mxu0 0.0
    %1237 = vmatpush1.msra.mxu0 0.0
    %1238 = vmatprep.subr.mxu0 0.0
    %1239 = vmatpush1.msra.mxu0 0.0
    %1240 = vmatprep.subr.mxu0 0.0
    %1241 = vmatpush1.msra.mxu0 0.0
    %1242 = vmatprep.subr.mxu0 0.0
    %1243 = vmatpush1.msra.mxu0 0.0
    %1244 = vmatprep.subr.mxu0 0.0
    %1245 = vmatpush1.msra.mxu0 0.0
    %1246 = vmatprep.subr.mxu0 0.0
    %1247 = vmatpush1.msra.mxu0 0.0
    %1248 = vmatprep.subr.mxu0 0.0
    %1249 = vmatpush1.msra.mxu0 0.0
    %1250 = vmatprep.subr.mxu0 0.0
    %1251 = vmatpush1.msra.mxu0 0.0
    %1252 = vmatprep.subr.mxu0 0.0
    %1253 = vmatpush1.msra.mxu0 0.0
    %1254 = vmatprep.subr.mxu0 0.0
    %1255 = vmatpush1.msra.mxu0 0.0
    %1256 = vmatprep.subr.mxu0 0.0
    %1257 = vmatpush1.msra.mxu0 0.0
    %1258 = vmatprep.subr.mxu0 0.0
    %1259 = vmatpush1.msra.mxu0 0.0
    %1260 = vmatprep.subr.mxu0 0.0
    %1261 = vmatpush1.msra.mxu0 0.0
    %1262 = vmatprep.subr.mxu0 0.0
    %1263 = vmatpush1.msra.mxu0 0.0
    %1264 = vmatprep.subr.mxu0 0.0
    %1265 = vmatpush1.msra.mxu0 0.0
    %1266 = vmatprep.subr.mxu0 0.0
    %1267 = vmatpush1.msra.mxu0 0.0
    %1268 = vmatprep.subr.mxu0 0.0
    %1269 = vmatpush1.msra.mxu0 0.0
    %1270 = vmatprep.subr.mxu0 0.0
    %1271 = vmatpush1.msra.mxu0 0.0
    %1272 = vmatprep.subr.mxu0 0.0
    %1273 = vmatpush1.msra.mxu0 0.0
    %1274 = vmatprep.mubr.f32.mxu0 0.0
    %1275 = vmatmul.mubr.f32.gmra.mrb[0].mxu0 %v1208
    %v1276 = vpop.f32.mrb[0].mxu0
    %v1277 = vadd.f32 %v1160, %v1276
    %v1278 = vpop.f32.mrb[0].mxu0
    %v1279 = vadd.f32 %v1160, %v1278
    %1280 = vdwg.mxu0
    %1281 = vmatprep.subr.mxu0 %v1145
    %1282 = vmatpush1.msra.mxu0 %v1144
    %1283 = vmatprep.subr.mxu0 %v1149
    %1284 = vmatpush1.msra.mxu0 %v1148
    %1285 = vmatprep.subr.mxu0 %v1153
    %1286 = vmatpush1.msra.mxu0 %v1152
    %1287 = vmatprep.subr.mxu0 %v1157
    %1288 = vmatpush1.msra.mxu0 %v1156
    %1289 = vmatprep.subr.mxu0 0.0
    %1290 = vmatpush1.msra.mxu0 0.0
    %1291 = vmatprep.subr.mxu0 0.0
    %1292 = vmatpush1.msra.mxu0 0.0
    %1293 = vmatprep.subr.mxu0 0.0
    %1294 = vmatpush1.msra.mxu0 0.0
    %1295 = vmatprep.subr.mxu0 0.0
    %1296 = vmatpush1.msra.mxu0 0.0
    %1297 = vmatprep.subr.mxu0 0.0
    %1298 = vmatpush1.msra.mxu0 0.0
    %1299 = vmatprep.subr.mxu0 0.0
    %1300 = vmatpush1.msra.mxu0 0.0
    %1301 = vmatprep.subr.mxu0 0.0
    %1302 = vmatpush1.msra.mxu0 0.0
    %1303 = vmatprep.subr.mxu0 0.0
    %1304 = vmatpush1.msra.mxu0 0.0
    %1305 = vmatprep.subr.mxu0 0.0
    %1306 = vmatpush1.msra.mxu0 0.0
    %1307 = vmatprep.subr.mxu0 0.0
    %1308 = vmatpush1.msra.mxu0 0.0
    %1309 = vmatprep.subr.mxu0 0.0
    %1310 = vmatpush1.msra.mxu0 0.0
    %1311 = vmatprep.subr.mxu0 0.0
    %1312 = vmatpush1.msra.mxu0 0.0
    %1313 = vmatprep.subr.mxu0 0.0
    %1314 = vmatpush1.msra.mxu0 0.0
    %1315 = vmatprep.subr.mxu0 0.0
    %1316 = vmatpush1.msra.mxu0 0.0
    %1317 = vmatprep.subr.mxu0 0.0
    %1318 = vmatpush1.msra.mxu0 0.0
    %1319 = vmatprep.subr.mxu0 0.0
    %1320 = vmatpush1.msra.mxu0 0.0
    %1321 = vmatprep.subr.mxu0 0.0
    %1322 = vmatpush1.msra.mxu0 0.0
    %1323 = vmatprep.subr.mxu0 0.0
    %1324 = vmatpush1.msra.mxu0 0.0
    %1325 = vmatprep.subr.mxu0 0.0
    %1326 = vmatpush1.msra.mxu0 0.0
    %1327 = vmatprep.subr.mxu0 0.0
    %1328 = vmatpush1.msra.mxu0 0.0
    %1329 = vmatprep.subr.mxu0 0.0
    %1330 = vmatpush1.msra.mxu0 0.0
    %1331 = vmatprep.subr.mxu0 0.0
    %1332 = vmatpush1.msra.mxu0 0.0
    %1333 = vmatprep.subr.mxu0 0.0
    %1334 = vmatpush1.msra.mxu0 0.0
    %1335 = vmatprep.subr.mxu0 0.0
    %1336 = vmatpush1.msra.mxu0 0.0
    %1337 = vmatprep.subr.mxu0 0.0
    %1338 = vmatpush1.msra.mxu0 0.0
    %1339 = vmatprep.subr.mxu0 0.0
    %1340 = vmatpush1.msra.mxu0 0.0
    %1341 = vmatprep.subr.mxu0 0.0
    %1342 = vmatpush1.msra.mxu0 0.0
    %1343 = vmatprep.subr.mxu0 0.0
    %1344 = vmatpush1.msra.mxu0 0.0
    %1345 = vmatprep.mubr.f32.mxu0 0.0
    %1346 = vmatmul.mubr.f32.gmra.mrb[0].mxu0 %v1208
    %v1347 = vpop.f32.mrb[0].mxu0
    %v1348 = vadd.f32 %v1160, %v1347
    %v1349 = vpop.f32.mrb[0].mxu0
    %v1350 = vadd.f32 %v1160, %v1349
    %1351 = vdwg.mxu0
    %v1352 = vadd.f32 %v1277, %v29
    %v1353 = vadd.f32 %v1279, %v30
    %v1354 = vadd.f32 %v1348, %v31
    %v1355 = vadd.f32 %v1350, %v32
    %1356 = vst [vmem:[#allocation5] sm:$0xff] %v1352
    %1357 = vst [vmem:[#allocation5 + $0x8] sm:$0xff] %v1353
    %1358 = vst [vmem:[#allocation5 + $0x10] sm:$0xff] %v1354
    %1359 = vst [vmem:[#allocation5 + $0x18] sm:$0xff] %v1355
    // Predicated region
    $region18: #{tpu_custom_call.1} parent=1 // pred_check
      _
    $region19: #{tpu_custom_call.1} parent=1 // pred_check_branch
      %1361 = sbr.rel (0) target = $region21
    $region20: #{tpu_custom_call.1} parent=1 // pred_region
      %s1363 = ssub.s32 512, 512
      %1364 = vsyncadd [#allocation4], %s1363
      %s1366 = sshll.u32 [#allocation5], 4
      %s1367 = int_to_ptr.vmem [resolvable:$true] %s1366
      %1369 = dma.vmem_to_hbm [thread:$0]  %s1367, 512, %s3, [#allocation4]
    $region21: #{tpu_custom_call.1} parent=1 // pred_fallthru
      _
    // Predicated region
    $region22: #{tpu_custom_call.1} parent=1 // pred_check
      _
    $region23: #{tpu_custom_call.1} parent=1 // pred_check_branch
      %1371 = sbr.rel (0) target = $region25
    $region24: #{tpu_custom_call.1} parent=1 // pred_region
      %1372 = dma.done [#allocation4], 512
    $region25: #{tpu_custom_call.1} parent=1 // pred_fallthru
      _
    %1373 = vsyncpa [#allocation3], 1
    %1374 = vsyncpa [#allocation4], 1

</llo_original>
